<compile_context>
chip_gen: v6e
topology: v6e:2x2x1
jax: 0.10.0
libtpu: 0.0.40
codegen_flags: <defaults>
</compile_context>

<pallas_src>
import functools
import math

import jax
import jax.numpy as jnp
from jax.experimental import pallas as pl


# ----------------------------- config ---------------------------------------
class Config:
    hidden_size = 32
    num_attention_heads = 4
    intermediate_size = 64
    initializer_range = 0.02
    layer_norm_eps = 1e-12
    # hidden_act = "gelu" (exact, erf-based)


def _gelu_exact(x):
    # HF "gelu": x * 0.5 * (1 + erf(x / sqrt(2)))
    return x * 0.5 * (1.0 + jax.lax.erf(x * (1.0 / math.sqrt(2.0))))


def _layernorm(x, g, b, eps):
    mu = jnp.mean(x, axis=-1, keepdims=True)
    var = jnp.mean((x - mu) ** 2, axis=-1, keepdims=True)
    return (x - mu) * jax.lax.rsqrt(var + eps) * g + b


# ------------------- fully fused PSUM (layers + average) kernel --------------
def psum_fused_kernel(h_ref, mask_ref,
                      wq_ref, bq_ref, wk_ref, bk_ref, wv_ref, bv_ref,
                      wo_ref, bo_ref, g1_ref, b1_ref,
                      wi_ref, bi_ref, wf_ref, bf_ref,
                      g2_ref, b2_ref,
                      out_ref, *, count, num_heads, head_dim, eps):
    H = num_heads * head_dim
    bf16 = jnp.bfloat16

    big_mask = mask_ref[...]                         # [BS, BS] additive (0 / -1e4 / -1e9)

    # constant 0/1 per-head column masks, hoisted above both loops
    col = jax.lax.broadcasted_iota(jnp.int32, (1, H), 1)
    head_masks = [
        jnp.where((col >= hd * head_dim) & (col < (hd + 1) * head_dim), 1.0, 0.0).astype(bf16)
        for hd in range(num_heads)
    ]

    acc = None
    for l in range(count):                           # static unroll (count small)
        h = h_ref[l]                                 # [BS, H] f32
        h_bf = h.astype(bf16)

        # ---- self-attention (batch folded into M rows) ----
        # 1/sqrt(head_dim) already folded into wq/bq host-side
        q = jnp.dot(h_bf, wq_ref[l], preferred_element_type=jnp.float32) + bq_ref[l]
        k = jnp.dot(h_bf, wk_ref[l], preferred_element_type=jnp.float32) + bk_ref[l]
        v = jnp.dot(h_bf, wv_ref[l], preferred_element_type=jnp.float32) + bv_ref[l]
        q_bf = q.astype(bf16)
        k_bf = k.astype(bf16)
        v_bf = v.astype(bf16)

        ctx = jnp.zeros_like(q)                      # [BS, H] f32 accumulator
        for m_h in head_masks:                       # static unroll, no lane slices
            s = jax.lax.dot_general(q_bf, k_bf * m_h, (((1,), (1,)), ((), ())),
                                    preferred_element_type=jnp.float32)
            s = s + big_mask                         # padding + cross-batch block mask
            s = s - jnp.max(s, axis=-1, keepdims=True)
            p = jnp.exp(s)
            p = p * pl.reciprocal(jnp.sum(p, axis=-1, keepdims=True), approx=True)
            ctx = ctx + jnp.dot(p.astype(bf16), v_bf * m_h,
                                preferred_element_type=jnp.float32)

        attn = jnp.dot(ctx.astype(bf16), wo_ref[l],
                       preferred_element_type=jnp.float32) + bo_ref[l]
        x1 = _layernorm(h + attn, g1_ref[l], b1_ref[l], eps)

        # ---- feed-forward ----
        inter = _gelu_exact(jnp.dot(x1.astype(bf16), wi_ref[l],
                                    preferred_element_type=jnp.float32) + bi_ref[l])
        ffn = jnp.dot(inter.astype(bf16), wf_ref[l],
                      preferred_element_type=jnp.float32) + bf_ref[l]
        y = _layernorm(x1 + ffn, g2_ref[l], b2_ref[l], eps)

        acc = y if acc is None else acc + y

    out_ref[...] = (acc * (1.0 / count)).astype(out_ref.dtype)


# ---------------------------- weight preparation ------------------------------
def prep_params(params_list, num_heads):
    """PyTorch Linear is y = x @ W.T + b (W is [out,in]); pre-transpose, fold the
    1/sqrt(head_dim) score scale into Wq/bq, cast matmul weights to bf16, and
    stack all `count` layers along a leading axis."""
    H = params_list[0]['Wq'].shape[0]
    scale = 1.0 / math.sqrt(H // num_heads)

    def stack(fn, dtype=jnp.float32):
        return jnp.stack([fn(p) for p in params_list], axis=0).astype(dtype)

    wq = stack(lambda p: p['Wq'].T * scale, jnp.bfloat16)
    bq = stack(lambda p: (p['bq'] * scale).reshape(1, -1))
    wk = stack(lambda p: p['Wk'].T, jnp.bfloat16)
    bk = stack(lambda p: p['bk'].reshape(1, -1))
    wv = stack(lambda p: p['Wv'].T, jnp.bfloat16)
    bv = stack(lambda p: p['bv'].reshape(1, -1))
    wo = stack(lambda p: p['Wo'].T, jnp.bfloat16)
    bo = stack(lambda p: p['bo'].reshape(1, -1))
    g1 = stack(lambda p: p['ln1_g'].reshape(1, -1))
    b1 = stack(lambda p: p['ln1_b'].reshape(1, -1))
    wi = stack(lambda p: p['Wi'].T, jnp.bfloat16)
    bi = stack(lambda p: p['bi'].reshape(1, -1))
    wf = stack(lambda p: p['Wout'].T, jnp.bfloat16)
    bf_ = stack(lambda p: p['bout'].reshape(1, -1))
    g2 = stack(lambda p: p['ln2_g'].reshape(1, -1))
    b2 = stack(lambda p: p['ln2_b'].reshape(1, -1))
    return [wq, bq, wk, bk, wv, bv, wo, bo, g1, b1, wi, bi, wf, bf_, g2, b2]


# ----------------------------- PSUM forward -----------------------------------
def psum_forward(layers, attention_mask, params_list, num_heads, eps):
    count = len(params_list)
    B, S, H = layers[0].shape

    # stack the last `count` hidden states (layers[-1], layers[-2], ...) and fold batch
    hiddens = jnp.stack([layers[-i - 1].reshape(B * S, H) for i in range(count)], axis=0)

    # combined [B*S, B*S] additive mask: per-key padding inside each batch block,
    # -1e9 across batches (block-diagonal); built host-side, zero kernel cost.
    mask_2d = attention_mask.reshape(B, S).astype(jnp.float32)
    same = jnp.arange(B)[:, None] == jnp.arange(B)[None, :]
    big = jnp.where(same[:, None, :, None], mask_2d[None, None, :, :], -1e9)
    big_mask = jnp.broadcast_to(big, (B, S, B, S)).reshape(B * S, B * S)

    stacked_params = prep_params(params_list, num_heads)

    kernel = functools.partial(psum_fused_kernel, count=count, num_heads=num_heads,
                               head_dim=H // num_heads, eps=eps)

    # Gridless single-step call: everything resident in VMEM, one launch, one store.
    out_flat = pl.pallas_call(
        kernel,
        out_shape=jax.ShapeDtypeStruct((B * S, H), layers[0].dtype),
    )(hiddens, big_mask, *stacked_params)
    return out_flat.reshape(B, S, H)


# ----------------------------- param init (like _init_weights) ---------------
def init_roberta_layer_params(key, H, I, std):
    ks = jax.random.split(key, 6)
    lin = lambda k, o, i: jax.random.normal(k, (o, i), jnp.float32) * std
    z = lambda n: jnp.zeros((n,), jnp.float32)
    return {
        'Wq': lin(ks[0], H, H), 'bq': z(H),
        'Wk': lin(ks[1], H, H), 'bk': z(H),
        'Wv': lin(ks[2], H, H), 'bv': z(H),
        'Wo': lin(ks[3], H, H), 'bo': z(H),
        'ln1_g': jnp.ones((H,), jnp.float32), 'ln1_b': z(H),
        'Wi': lin(ks[4], I, H), 'bi': z(I),
        'Wout': lin(ks[5], H, I), 'bout': z(H),
        'ln2_g': jnp.ones((H,), jnp.float32), 'ln2_b': z(H),
    }


# ----------------------------- pure-JAX reference ----------------------------
# Matches the kernel's matmul precision (bf16 operands, f32 accumulate) so the
# comparison isolates kernel bugs rather than dtype policy.
def roberta_layer_ref(h, mask_b11s, p, num_heads, eps):
    B, S, H = h.shape
    dH = H // num_heads
    bf = jnp.bfloat16

    def lin(x, W, b):
        return jnp.einsum('bsh,oh->bso', x.astype(bf), W.astype(bf),
                          preferred_element_type=jnp.float32) + b

    split = lambda x: x.reshape(B, S, num_heads, dH).transpose(0, 2, 1, 3)
    q = split(lin(h, p['Wq'], p['bq']))
    k = split(lin(h, p['Wk'], p['bk']))
    v = split(lin(h, p['Wv'], p['bv']))
    scores = jnp.einsum('bhqd,bhkd->bhqk', q.astype(bf), k.astype(bf),
                        preferred_element_type=jnp.float32) / math.sqrt(dH) + mask_b11s
    probs = jax.nn.softmax(scores, axis=-1)
    ctx = jnp.einsum('bhqk,bhkd->bhqd', probs.astype(bf), v.astype(bf),
                     preferred_element_type=jnp.float32)
    ctx = ctx.transpose(0, 2, 1, 3).reshape(B, S, H)
    x1 = _layernorm(h + lin(ctx, p['Wo'], p['bo']), p['ln1_g'], p['ln1_b'], eps)
    inter = _gelu_exact(lin(x1, p['Wi'], p['bi']))
    return _layernorm(x1 + lin(inter, p['Wout'], p['bout']),
                      p['ln2_g'], p['ln2_b'], eps)


# ----------------------------- main -------------------------------------------
if __name__ == "__main__":
    cfg = Config()
    B, S = 2, 8
    H, I, nH = cfg.hidden_size, cfg.intermediate_size, cfg.num_attention_heads
    count = 2
    n_hidden_layers = 3   # PSUM consumes layers[-1], layers[-2], ...

    key = jax.random.PRNGKey(0)
    k_layers, k_params = jax.random.split(key, 2)
    layer_keys = jax.random.split(k_layers, n_hidden_layers)
    layers = [jax.random.normal(lk, (B, S, H), jnp.float32) for lk in layer_keys]

    # HF-style additive extended attention mask [B, 1, 1, S]
    valid_lens = jnp.array([S, S - 2])
    pad = jnp.arange(S)[None, :] >= valid_lens[:, None]
    attention_mask = jnp.where(pad, -10000.0, 0.0).astype(jnp.float32).reshape(B, 1, 1, S)

    param_keys = jax.random.split(k_params, count)
    params_list = [init_roberta_layer_params(pk, H, I, cfg.initializer_range)
                   for pk in param_keys]

    out = psum_forward(layers, attention_mask, params_list, nH, cfg.layer_norm_eps)
    out = jax.block_until_ready(out)

    # verify against a pure-JAX reference with matching matmul precision
    ref_outs = [roberta_layer_ref(layers[-i - 1], attention_mask, params_list[i],
                                  nH, cfg.layer_norm_eps) for i in range(count)]
    ref = sum(ref_outs) / count
    max_err = float(jnp.max(jnp.abs(out - ref)))
    # tolerance covers approx EUP reciprocal + bf16 rounding-order differences
    assert jnp.allclose(out, ref, atol=1e-2, rtol=1e-2), f"max_err={max_err}"

    print("KERNEL_OK")
</pallas_src>

<mosaic_0001>
module attributes {stable_mosaic.version = 11 : i64} {
  func.func @psum_fused_kernel(%arg0: memref<2x16x32xf32, #tpu.memory_space<vmem>>, %arg1: memref<16x16xf32, #tpu.memory_space<vmem>>, %arg2: memref<2x32x32xbf16, #tpu.memory_space<vmem>>, %arg3: memref<2x1x32xf32, #tpu.memory_space<vmem>>, %arg4: memref<2x32x32xbf16, #tpu.memory_space<vmem>>, %arg5: memref<2x1x32xf32, #tpu.memory_space<vmem>>, %arg6: memref<2x32x32xbf16, #tpu.memory_space<vmem>>, %arg7: memref<2x1x32xf32, #tpu.memory_space<vmem>>, %arg8: memref<2x32x32xbf16, #tpu.memory_space<vmem>>, %arg9: memref<2x1x32xf32, #tpu.memory_space<vmem>>, %arg10: memref<2x1x32xf32, #tpu.memory_space<vmem>>, %arg11: memref<2x1x32xf32, #tpu.memory_space<vmem>>, %arg12: memref<2x32x64xbf16, #tpu.memory_space<vmem>>, %arg13: memref<2x1x64xf32, #tpu.memory_space<vmem>>, %arg14: memref<2x64x32xbf16, #tpu.memory_space<vmem>>, %arg15: memref<2x1x32xf32, #tpu.memory_space<vmem>>, %arg16: memref<2x1x32xf32, #tpu.memory_space<vmem>>, %arg17: memref<2x1x32xf32, #tpu.memory_space<vmem>>, %arg18: memref<16x32xf32, #tpu.memory_space<vmem>>) attributes {dimension_semantics = [], scalar_prefetch = 0 : i64, scratch_operands = 0 : i64, tpu.core_type = #tpu.core_type<tc>} {
    %c0 = arith.constant 0 : index
    %c0_0 = arith.constant 0 : index
    %0 = vector.load %arg1[%c0, %c0_0] : memref<16x16xf32, #tpu.memory_space<vmem>>, vector<16x16xf32>
    %1 = tpu.iota {dimensions = array<i32: 1>} : vector<1x32xi32>
    %c0_i32 = arith.constant 0 : i32
    %2 = vector.broadcast %c0_i32 : i32 to vector<1x32xi32>
    %3 = arith.cmpi sge, %1, %2 : vector<1x32xi32>
    %c8_i32 = arith.constant 8 : i32
    %4 = vector.broadcast %c8_i32 : i32 to vector<1x32xi32>
    %5 = arith.cmpi slt, %1, %4 : vector<1x32xi32>
    %6 = arith.andi %3, %5 : vector<1x32xi1>
    %cst = arith.constant 1.000000e+00 : f32
    %cst_1 = arith.constant 0.000000e+00 : f32
    %7 = vector.broadcast %cst : f32 to vector<1x32xf32>
    %8 = vector.broadcast %cst_1 : f32 to vector<1x32xf32>
    %9 = arith.select %6, %7, %8 : vector<1x32xi1>, vector<1x32xf32>
    %10 = arith.truncf %9 : vector<1x32xf32> to vector<1x32xbf16>
    %c8_i32_2 = arith.constant 8 : i32
    %11 = vector.broadcast %c8_i32_2 : i32 to vector<1x32xi32>
    %12 = arith.cmpi sge, %1, %11 : vector<1x32xi32>
    %c16_i32 = arith.constant 16 : i32
    %13 = vector.broadcast %c16_i32 : i32 to vector<1x32xi32>
    %14 = arith.cmpi slt, %1, %13 : vector<1x32xi32>
    %15 = arith.andi %12, %14 : vector<1x32xi1>
    %cst_3 = arith.constant 1.000000e+00 : f32
    %cst_4 = arith.constant 0.000000e+00 : f32
    %16 = vector.broadcast %cst_3 : f32 to vector<1x32xf32>
    %17 = vector.broadcast %cst_4 : f32 to vector<1x32xf32>
    %18 = arith.select %15, %16, %17 : vector<1x32xi1>, vector<1x32xf32>
    %19 = arith.truncf %18 : vector<1x32xf32> to vector<1x32xbf16>
    %c16_i32_5 = arith.constant 16 : i32
    %20 = vector.broadcast %c16_i32_5 : i32 to vector<1x32xi32>
    %21 = arith.cmpi sge, %1, %20 : vector<1x32xi32>
    %c24_i32 = arith.constant 24 : i32
    %22 = vector.broadcast %c24_i32 : i32 to vector<1x32xi32>
    %23 = arith.cmpi slt, %1, %22 : vector<1x32xi32>
    %24 = arith.andi %21, %23 : vector<1x32xi1>
    %cst_6 = arith.constant 1.000000e+00 : f32
    %cst_7 = arith.constant 0.000000e+00 : f32
    %25 = vector.broadcast %cst_6 : f32 to vector<1x32xf32>
    %26 = vector.broadcast %cst_7 : f32 to vector<1x32xf32>
    %27 = arith.select %24, %25, %26 : vector<1x32xi1>, vector<1x32xf32>
    %28 = arith.truncf %27 : vector<1x32xf32> to vector<1x32xbf16>
    %c24_i32_8 = arith.constant 24 : i32
    %29 = vector.broadcast %c24_i32_8 : i32 to vector<1x32xi32>
    %30 = arith.cmpi sge, %1, %29 : vector<1x32xi32>
    %c32_i32 = arith.constant 32 : i32
    %31 = vector.broadcast %c32_i32 : i32 to vector<1x32xi32>
    %32 = arith.cmpi slt, %1, %31 : vector<1x32xi32>
    %33 = arith.andi %30, %32 : vector<1x32xi1>
    %cst_9 = arith.constant 1.000000e+00 : f32
    %cst_10 = arith.constant 0.000000e+00 : f32
    %34 = vector.broadcast %cst_9 : f32 to vector<1x32xf32>
    %35 = vector.broadcast %cst_10 : f32 to vector<1x32xf32>
    %36 = arith.select %33, %34, %35 : vector<1x32xi1>, vector<1x32xf32>
    %37 = arith.truncf %36 : vector<1x32xf32> to vector<1x32xbf16>
    %c0_11 = arith.constant 0 : index
    %c0_12 = arith.constant 0 : index
    %c0_13 = arith.constant 0 : index
    %38 = vector.load %arg0[%c0_11, %c0_12, %c0_13] : memref<2x16x32xf32, #tpu.memory_space<vmem>>, vector<1x16x32xf32>
    %39 = vector.shape_cast %38 : vector<1x16x32xf32> to vector<16x32xf32>
    %40 = arith.truncf %39 : vector<16x32xf32> to vector<16x32xbf16>
    %c0_14 = arith.constant 0 : index
    %c0_15 = arith.constant 0 : index
    %c0_16 = arith.constant 0 : index
    %41 = vector.load %arg2[%c0_14, %c0_15, %c0_16] : memref<2x32x32xbf16, #tpu.memory_space<vmem>>, vector<1x32x32xbf16>
    %42 = vector.shape_cast %41 : vector<1x32x32xbf16> to vector<32x32xbf16>
    %cst_17 = arith.constant dense<0.000000e+00> : vector<16x32xf32>
    %43 = tpu.matmul %40, %42, %cst_17 {dimension_numbers = #tpu.dot_dimension_numbers<[1], [0], [0], [1], [0, 0, 1, 1], [], []>} : vector<16x32xbf16>, vector<32x32xbf16>, vector<16x32xf32> -> vector<16x32xf32>
    %c0_18 = arith.constant 0 : index
    %c0_19 = arith.constant 0 : index
    %c0_20 = arith.constant 0 : index
    %44 = vector.load %arg3[%c0_18, %c0_19, %c0_20] : memref<2x1x32xf32, #tpu.memory_space<vmem>>, vector<1x1x32xf32>
    %45 = vector.shape_cast %44 : vector<1x1x32xf32> to vector<1x32xf32>
    %46 = vector.broadcast %45 : vector<1x32xf32> to vector<16x32xf32>
    %47 = arith.addf %43, %46 : vector<16x32xf32>
    %c0_21 = arith.constant 0 : index
    %c0_22 = arith.constant 0 : index
    %c0_23 = arith.constant 0 : index
    %48 = vector.load %arg4[%c0_21, %c0_22, %c0_23] : memref<2x32x32xbf16, #tpu.memory_space<vmem>>, vector<1x32x32xbf16>
    %49 = vector.shape_cast %48 : vector<1x32x32xbf16> to vector<32x32xbf16>
    %cst_24 = arith.constant dense<0.000000e+00> : vector<16x32xf32>
    %50 = tpu.matmul %40, %49, %cst_24 {dimension_numbers = #tpu.dot_dimension_numbers<[1], [0], [0], [1], [0, 0, 1, 1], [], []>} : vector<16x32xbf16>, vector<32x32xbf16>, vector<16x32xf32> -> vector<16x32xf32>
    %c0_25 = arith.constant 0 : index
    %c0_26 = arith.constant 0 : index
    %c0_27 = arith.constant 0 : index
    %51 = vector.load %arg5[%c0_25, %c0_26, %c0_27] : memref<2x1x32xf32, #tpu.memory_space<vmem>>, vector<1x1x32xf32>
    %52 = vector.shape_cast %51 : vector<1x1x32xf32> to vector<1x32xf32>
    %53 = vector.broadcast %52 : vector<1x32xf32> to vector<16x32xf32>
    %54 = arith.addf %50, %53 : vector<16x32xf32>
    %c0_28 = arith.constant 0 : index
    %c0_29 = arith.constant 0 : index
    %c0_30 = arith.constant 0 : index
    %55 = vector.load %arg6[%c0_28, %c0_29, %c0_30] : memref<2x32x32xbf16, #tpu.memory_space<vmem>>, vector<1x32x32xbf16>
    %56 = vector.shape_cast %55 : vector<1x32x32xbf16> to vector<32x32xbf16>
    %cst_31 = arith.constant dense<0.000000e+00> : vector<16x32xf32>
    %57 = tpu.matmul %40, %56, %cst_31 {dimension_numbers = #tpu.dot_dimension_numbers<[1], [0], [0], [1], [0, 0, 1, 1], [], []>} : vector<16x32xbf16>, vector<32x32xbf16>, vector<16x32xf32> -> vector<16x32xf32>
    %c0_32 = arith.constant 0 : index
    %c0_33 = arith.constant 0 : index
    %c0_34 = arith.constant 0 : index
    %58 = vector.load %arg7[%c0_32, %c0_33, %c0_34] : memref<2x1x32xf32, #tpu.memory_space<vmem>>, vector<1x1x32xf32>
    %59 = vector.shape_cast %58 : vector<1x1x32xf32> to vector<1x32xf32>
    %60 = vector.broadcast %59 : vector<1x32xf32> to vector<16x32xf32>
    %61 = arith.addf %57, %60 : vector<16x32xf32>
    %62 = arith.truncf %47 : vector<16x32xf32> to vector<16x32xbf16>
    %63 = arith.truncf %54 : vector<16x32xf32> to vector<16x32xbf16>
    %64 = arith.truncf %61 : vector<16x32xf32> to vector<16x32xbf16>
    %cst_35 = arith.constant 0.000000e+00 : f32
    %65 = vector.broadcast %cst_35 : f32 to vector<16x32xf32>
    %66 = vector.broadcast %10 : vector<1x32xbf16> to vector<16x32xbf16>
    %67 = arith.mulf %63, %66 : vector<16x32xbf16>
    %cst_36 = arith.constant dense<0.000000e+00> : vector<16x16xf32>
    %68 = tpu.matmul %62, %67, %cst_36 {dimension_numbers = #tpu.dot_dimension_numbers<[1], [1], [0], [0], [0, 0, 1, 0], [], []>} : vector<16x32xbf16>, vector<16x32xbf16>, vector<16x16xf32> -> vector<16x16xf32>
    %69 = arith.addf %68, %0 : vector<16x16xf32>
    %cst_37 = arith.constant dense<0xFF800000> : vector<16xf32>
    %70 = vector.multi_reduction <maximumf>, %69, %cst_37 [1] : vector<16x16xf32> to vector<16xf32>
    %71 = vector.shape_cast %70 : vector<16xf32> to vector<16x1xf32>
    %72 = vector.broadcast %71 : vector<16x1xf32> to vector<16x16xf32>
    %73 = arith.subf %69, %72 : vector<16x16xf32>
    %74 = math.exp %73 : vector<16x16xf32>
    %cst_38 = arith.constant dense<0.000000e+00> : vector<16xf32>
    %75 = vector.multi_reduction <add>, %74, %cst_38 [1] : vector<16x16xf32> to vector<16xf32>
    %76 = vector.shape_cast %75 : vector<16xf32> to vector<16x1xf32>
    %77 = tpu.reciprocal %76 {approx = true} : vector<16x1xf32> -> vector<16x1xf32>
    %78 = vector.broadcast %77 : vector<16x1xf32> to vector<16x16xf32>
    %79 = arith.mulf %74, %78 : vector<16x16xf32>
    %80 = arith.truncf %79 : vector<16x16xf32> to vector<16x16xbf16>
    %81 = vector.broadcast %10 : vector<1x32xbf16> to vector<16x32xbf16>
    %82 = arith.mulf %64, %81 : vector<16x32xbf16>
    %cst_39 = arith.constant dense<0.000000e+00> : vector<16x32xf32>
    %83 = tpu.matmul %80, %82, %cst_39 {dimension_numbers = #tpu.dot_dimension_numbers<[1], [0], [0], [1], [0, 0, 1, 1], [], []>} : vector<16x16xbf16>, vector<16x32xbf16>, vector<16x32xf32> -> vector<16x32xf32>
    %84 = arith.addf %65, %83 : vector<16x32xf32>
    %85 = vector.broadcast %19 : vector<1x32xbf16> to vector<16x32xbf16>
    %86 = arith.mulf %63, %85 : vector<16x32xbf16>
    %cst_40 = arith.constant dense<0.000000e+00> : vector<16x16xf32>
    %87 = tpu.matmul %62, %86, %cst_40 {dimension_numbers = #tpu.dot_dimension_numbers<[1], [1], [0], [0], [0, 0, 1, 0], [], []>} : vector<16x32xbf16>, vector<16x32xbf16>, vector<16x16xf32> -> vector<16x16xf32>
    %88 = arith.addf %87, %0 : vector<16x16xf32>
    %cst_41 = arith.constant dense<0xFF800000> : vector<16xf32>
    %89 = vector.multi_reduction <maximumf>, %88, %cst_41 [1] : vector<16x16xf32> to vector<16xf32>
    %90 = vector.shape_cast %89 : vector<16xf32> to vector<16x1xf32>
    %91 = vector.broadcast %90 : vector<16x1xf32> to vector<16x16xf32>
    %92 = arith.subf %88, %91 : vector<16x16xf32>
    %93 = math.exp %92 : vector<16x16xf32>
    %cst_42 = arith.constant dense<0.000000e+00> : vector<16xf32>
    %94 = vector.multi_reduction <add>, %93, %cst_42 [1] : vector<16x16xf32> to vector<16xf32>
    %95 = vector.shape_cast %94 : vector<16xf32> to vector<16x1xf32>
    %96 = tpu.reciprocal %95 {approx = true} : vector<16x1xf32> -> vector<16x1xf32>
    %97 = vector.broadcast %96 : vector<16x1xf32> to vector<16x16xf32>
    %98 = arith.mulf %93, %97 : vector<16x16xf32>
    %99 = arith.truncf %98 : vector<16x16xf32> to vector<16x16xbf16>
    %100 = vector.broadcast %19 : vector<1x32xbf16> to vector<16x32xbf16>
    %101 = arith.mulf %64, %100 : vector<16x32xbf16>
    %cst_43 = arith.constant dense<0.000000e+00> : vector<16x32xf32>
    %102 = tpu.matmul %99, %101, %cst_43 {dimension_numbers = #tpu.dot_dimension_numbers<[1], [0], [0], [1], [0, 0, 1, 1], [], []>} : vector<16x16xbf16>, vector<16x32xbf16>, vector<16x32xf32> -> vector<16x32xf32>
    %103 = arith.addf %84, %102 : vector<16x32xf32>
    %104 = vector.broadcast %28 : vector<1x32xbf16> to vector<16x32xbf16>
    %105 = arith.mulf %63, %104 : vector<16x32xbf16>
    %cst_44 = arith.constant dense<0.000000e+00> : vector<16x16xf32>
    %106 = tpu.matmul %62, %105, %cst_44 {dimension_numbers = #tpu.dot_dimension_numbers<[1], [1], [0], [0], [0, 0, 1, 0], [], []>} : vector<16x32xbf16>, vector<16x32xbf16>, vector<16x16xf32> -> vector<16x16xf32>
    %107 = arith.addf %106, %0 : vector<16x16xf32>
    %cst_45 = arith.constant dense<0xFF800000> : vector<16xf32>
    %108 = vector.multi_reduction <maximumf>, %107, %cst_45 [1] : vector<16x16xf32> to vector<16xf32>
    %109 = vector.shape_cast %108 : vector<16xf32> to vector<16x1xf32>
    %110 = vector.broadcast %109 : vector<16x1xf32> to vector<16x16xf32>
    %111 = arith.subf %107, %110 : vector<16x16xf32>
    %112 = math.exp %111 : vector<16x16xf32>
    %cst_46 = arith.constant dense<0.000000e+00> : vector<16xf32>
    %113 = vector.multi_reduction <add>, %112, %cst_46 [1] : vector<16x16xf32> to vector<16xf32>
    %114 = vector.shape_cast %113 : vector<16xf32> to vector<16x1xf32>
    %115 = tpu.reciprocal %114 {approx = true} : vector<16x1xf32> -> vector<16x1xf32>
    %116 = vector.broadcast %115 : vector<16x1xf32> to vector<16x16xf32>
    %117 = arith.mulf %112, %116 : vector<16x16xf32>
    %118 = arith.truncf %117 : vector<16x16xf32> to vector<16x16xbf16>
    %119 = vector.broadcast %28 : vector<1x32xbf16> to vector<16x32xbf16>
    %120 = arith.mulf %64, %119 : vector<16x32xbf16>
    %cst_47 = arith.constant dense<0.000000e+00> : vector<16x32xf32>
    %121 = tpu.matmul %118, %120, %cst_47 {dimension_numbers = #tpu.dot_dimension_numbers<[1], [0], [0], [1], [0, 0, 1, 1], [], []>} : vector<16x16xbf16>, vector<16x32xbf16>, vector<16x32xf32> -> vector<16x32xf32>
    %122 = arith.addf %103, %121 : vector<16x32xf32>
    %123 = vector.broadcast %37 : vector<1x32xbf16> to vector<16x32xbf16>
    %124 = arith.mulf %63, %123 : vector<16x32xbf16>
    %cst_48 = arith.constant dense<0.000000e+00> : vector<16x16xf32>
    %125 = tpu.matmul %62, %124, %cst_48 {dimension_numbers = #tpu.dot_dimension_numbers<[1], [1], [0], [0], [0, 0, 1, 0], [], []>} : vector<16x32xbf16>, vector<16x32xbf16>, vector<16x16xf32> -> vector<16x16xf32>
    %126 = arith.addf %125, %0 : vector<16x16xf32>
    %cst_49 = arith.constant dense<0xFF800000> : vector<16xf32>
    %127 = vector.multi_reduction <maximumf>, %126, %cst_49 [1] : vector<16x16xf32> to vector<16xf32>
    %128 = vector.shape_cast %127 : vector<16xf32> to vector<16x1xf32>
    %129 = vector.broadcast %128 : vector<16x1xf32> to vector<16x16xf32>
    %130 = arith.subf %126, %129 : vector<16x16xf32>
    %131 = math.exp %130 : vector<16x16xf32>
    %cst_50 = arith.constant dense<0.000000e+00> : vector<16xf32>
    %132 = vector.multi_reduction <add>, %131, %cst_50 [1] : vector<16x16xf32> to vector<16xf32>
    %133 = vector.shape_cast %132 : vector<16xf32> to vector<16x1xf32>
    %134 = tpu.reciprocal %133 {approx = true} : vector<16x1xf32> -> vector<16x1xf32>
    %135 = vector.broadcast %134 : vector<16x1xf32> to vector<16x16xf32>
    %136 = arith.mulf %131, %135 : vector<16x16xf32>
    %137 = arith.truncf %136 : vector<16x16xf32> to vector<16x16xbf16>
    %138 = vector.broadcast %37 : vector<1x32xbf16> to vector<16x32xbf16>
    %139 = arith.mulf %64, %138 : vector<16x32xbf16>
    %cst_51 = arith.constant dense<0.000000e+00> : vector<16x32xf32>
    %140 = tpu.matmul %137, %139, %cst_51 {dimension_numbers = #tpu.dot_dimension_numbers<[1], [0], [0], [1], [0, 0, 1, 1], [], []>} : vector<16x16xbf16>, vector<16x32xbf16>, vector<16x32xf32> -> vector<16x32xf32>
    %141 = arith.addf %122, %140 : vector<16x32xf32>
    %142 = arith.truncf %141 : vector<16x32xf32> to vector<16x32xbf16>
    %c0_52 = arith.constant 0 : index
    %c0_53 = arith.constant 0 : index
    %c0_54 = arith.constant 0 : index
    %143 = vector.load %arg8[%c0_52, %c0_53, %c0_54] : memref<2x32x32xbf16, #tpu.memory_space<vmem>>, vector<1x32x32xbf16>
    %144 = vector.shape_cast %143 : vector<1x32x32xbf16> to vector<32x32xbf16>
    %cst_55 = arith.constant dense<0.000000e+00> : vector<16x32xf32>
    %145 = tpu.matmul %142, %144, %cst_55 {dimension_numbers = #tpu.dot_dimension_numbers<[1], [0], [0], [1], [0, 0, 1, 1], [], []>} : vector<16x32xbf16>, vector<32x32xbf16>, vector<16x32xf32> -> vector<16x32xf32>
    %c0_56 = arith.constant 0 : index
    %c0_57 = arith.constant 0 : index
    %c0_58 = arith.constant 0 : index
    %146 = vector.load %arg9[%c0_56, %c0_57, %c0_58] : memref<2x1x32xf32, #tpu.memory_space<vmem>>, vector<1x1x32xf32>
    %147 = vector.shape_cast %146 : vector<1x1x32xf32> to vector<1x32xf32>
    %148 = vector.broadcast %147 : vector<1x32xf32> to vector<16x32xf32>
    %149 = arith.addf %145, %148 : vector<16x32xf32>
    %150 = arith.addf %39, %149 : vector<16x32xf32>
    %c0_59 = arith.constant 0 : index
    %c0_60 = arith.constant 0 : index
    %c0_61 = arith.constant 0 : index
    %151 = vector.load %arg10[%c0_59, %c0_60, %c0_61] : memref<2x1x32xf32, #tpu.memory_space<vmem>>, vector<1x1x32xf32>
    %152 = vector.shape_cast %151 : vector<1x1x32xf32> to vector<1x32xf32>
    %c0_62 = arith.constant 0 : index
    %c0_63 = arith.constant 0 : index
    %c0_64 = arith.constant 0 : index
    %153 = vector.load %arg11[%c0_62, %c0_63, %c0_64] : memref<2x1x32xf32, #tpu.memory_space<vmem>>, vector<1x1x32xf32>
    %154 = vector.shape_cast %153 : vector<1x1x32xf32> to vector<1x32xf32>
    %cst_65 = arith.constant dense<0.000000e+00> : vector<16xf32>
    %155 = vector.multi_reduction <add>, %150, %cst_65 [1] : vector<16x32xf32> to vector<16xf32>
    %156 = vector.shape_cast %155 : vector<16xf32> to vector<16x1xf32>
    %cst_66 = arith.constant 3.200000e+01 : f32
    %157 = vector.broadcast %cst_66 : f32 to vector<16x1xf32>
    %158 = arith.divf %156, %157 : vector<16x1xf32>
    %159 = vector.broadcast %158 : vector<16x1xf32> to vector<16x32xf32>
    %160 = arith.subf %150, %159 : vector<16x32xf32>
    %161 = arith.mulf %160, %160 : vector<16x32xf32>
    %cst_67 = arith.constant dense<0.000000e+00> : vector<16xf32>
    %162 = vector.multi_reduction <add>, %161, %cst_67 [1] : vector<16x32xf32> to vector<16xf32>
    %163 = vector.shape_cast %162 : vector<16xf32> to vector<16x1xf32>
    %cst_68 = arith.constant 3.200000e+01 : f32
    %164 = vector.broadcast %cst_68 : f32 to vector<16x1xf32>
    %165 = arith.divf %163, %164 : vector<16x1xf32>
    %166 = vector.broadcast %158 : vector<16x1xf32> to vector<16x32xf32>
    %167 = arith.subf %150, %166 : vector<16x32xf32>
    %cst_69 = arith.constant 9.99999996E-13 : f32
    %168 = vector.broadcast %cst_69 : f32 to vector<16x1xf32>
    %169 = arith.addf %165, %168 : vector<16x1xf32>
    %170 = math.rsqrt %169 : vector<16x1xf32>
    %171 = vector.broadcast %170 : vector<16x1xf32> to vector<16x32xf32>
    %172 = arith.mulf %167, %171 : vector<16x32xf32>
    %173 = vector.broadcast %152 : vector<1x32xf32> to vector<16x32xf32>
    %174 = arith.mulf %172, %173 : vector<16x32xf32>
    %175 = vector.broadcast %154 : vector<1x32xf32> to vector<16x32xf32>
    %176 = arith.addf %174, %175 : vector<16x32xf32>
    %177 = arith.truncf %176 : vector<16x32xf32> to vector<16x32xbf16>
    %c0_70 = arith.constant 0 : index
    %c0_71 = arith.constant 0 : index
    %c0_72 = arith.constant 0 : index
    %178 = vector.load %arg12[%c0_70, %c0_71, %c0_72] : memref<2x32x64xbf16, #tpu.memory_space<vmem>>, vector<1x32x64xbf16>
    %179 = vector.shape_cast %178 : vector<1x32x64xbf16> to vector<32x64xbf16>
    %cst_73 = arith.constant dense<0.000000e+00> : vector<16x64xf32>
    %180 = tpu.matmul %177, %179, %cst_73 {dimension_numbers = #tpu.dot_dimension_numbers<[1], [0], [0], [1], [0, 0, 1, 1], [], []>} : vector<16x32xbf16>, vector<32x64xbf16>, vector<16x64xf32> -> vector<16x64xf32>
    %c0_74 = arith.constant 0 : index
    %c0_75 = arith.constant 0 : index
    %c0_76 = arith.constant 0 : index
    %181 = vector.load %arg13[%c0_74, %c0_75, %c0_76] : memref<2x1x64xf32, #tpu.memory_space<vmem>>, vector<1x1x64xf32>
    %182 = vector.shape_cast %181 : vector<1x1x64xf32> to vector<1x64xf32>
    %183 = vector.broadcast %182 : vector<1x64xf32> to vector<16x64xf32>
    %184 = arith.addf %180, %183 : vector<16x64xf32>
    %cst_77 = arith.constant 5.000000e-01 : f32
    %185 = vector.broadcast %cst_77 : f32 to vector<16x64xf32>
    %186 = arith.mulf %184, %185 : vector<16x64xf32>
    %cst_78 = arith.constant 0.707106769 : f32
    %187 = vector.broadcast %cst_78 : f32 to vector<16x64xf32>
    %188 = arith.mulf %184, %187 : vector<16x64xf32>
    %189 = math.erf %188 : vector<16x64xf32>
    %cst_79 = arith.constant 1.000000e+00 : f32
    %190 = vector.broadcast %cst_79 : f32 to vector<16x64xf32>
    %191 = arith.addf %190, %189 : vector<16x64xf32>
    %192 = arith.mulf %186, %191 : vector<16x64xf32>
    %193 = arith.truncf %192 : vector<16x64xf32> to vector<16x64xbf16>
    %c0_80 = arith.constant 0 : index
    %c0_81 = arith.constant 0 : index
    %c0_82 = arith.constant 0 : index
    %194 = vector.load %arg14[%c0_80, %c0_81, %c0_82] : memref<2x64x32xbf16, #tpu.memory_space<vmem>>, vector<1x64x32xbf16>
    %195 = vector.shape_cast %194 : vector<1x64x32xbf16> to vector<64x32xbf16>
    %cst_83 = arith.constant dense<0.000000e+00> : vector<16x32xf32>
    %196 = tpu.matmul %193, %195, %cst_83 {dimension_numbers = #tpu.dot_dimension_numbers<[1], [0], [0], [1], [0, 0, 1, 1], [], []>} : vector<16x64xbf16>, vector<64x32xbf16>, vector<16x32xf32> -> vector<16x32xf32>
    %c0_84 = arith.constant 0 : index
    %c0_85 = arith.constant 0 : index
    %c0_86 = arith.constant 0 : index
    %197 = vector.load %arg15[%c0_84, %c0_85, %c0_86] : memref<2x1x32xf32, #tpu.memory_space<vmem>>, vector<1x1x32xf32>
    %198 = vector.shape_cast %197 : vector<1x1x32xf32> to vector<1x32xf32>
    %199 = vector.broadcast %198 : vector<1x32xf32> to vector<16x32xf32>
    %200 = arith.addf %196, %199 : vector<16x32xf32>
    %201 = arith.addf %176, %200 : vector<16x32xf32>
    %c0_87 = arith.constant 0 : index
    %c0_88 = arith.constant 0 : index
    %c0_89 = arith.constant 0 : index
    %202 = vector.load %arg16[%c0_87, %c0_88, %c0_89] : memref<2x1x32xf32, #tpu.memory_space<vmem>>, vector<1x1x32xf32>
    %203 = vector.shape_cast %202 : vector<1x1x32xf32> to vector<1x32xf32>
    %c0_90 = arith.constant 0 : index
    %c0_91 = arith.constant 0 : index
    %c0_92 = arith.constant 0 : index
    %204 = vector.load %arg17[%c0_90, %c0_91, %c0_92] : memref<2x1x32xf32, #tpu.memory_space<vmem>>, vector<1x1x32xf32>
    %205 = vector.shape_cast %204 : vector<1x1x32xf32> to vector<1x32xf32>
    %cst_93 = arith.constant dense<0.000000e+00> : vector<16xf32>
    %206 = vector.multi_reduction <add>, %201, %cst_93 [1] : vector<16x32xf32> to vector<16xf32>
    %207 = vector.shape_cast %206 : vector<16xf32> to vector<16x1xf32>
    %cst_94 = arith.constant 3.200000e+01 : f32
    %208 = vector.broadcast %cst_94 : f32 to vector<16x1xf32>
    %209 = arith.divf %207, %208 : vector<16x1xf32>
    %210 = vector.broadcast %209 : vector<16x1xf32> to vector<16x32xf32>
    %211 = arith.subf %201, %210 : vector<16x32xf32>
    %212 = arith.mulf %211, %211 : vector<16x32xf32>
    %cst_95 = arith.constant dense<0.000000e+00> : vector<16xf32>
    %213 = vector.multi_reduction <add>, %212, %cst_95 [1] : vector<16x32xf32> to vector<16xf32>
    %214 = vector.shape_cast %213 : vector<16xf32> to vector<16x1xf32>
    %cst_96 = arith.constant 3.200000e+01 : f32
    %215 = vector.broadcast %cst_96 : f32 to vector<16x1xf32>
    %216 = arith.divf %214, %215 : vector<16x1xf32>
    %217 = vector.broadcast %209 : vector<16x1xf32> to vector<16x32xf32>
    %218 = arith.subf %201, %217 : vector<16x32xf32>
    %cst_97 = arith.constant 9.99999996E-13 : f32
    %219 = vector.broadcast %cst_97 : f32 to vector<16x1xf32>
    %220 = arith.addf %216, %219 : vector<16x1xf32>
    %221 = math.rsqrt %220 : vector<16x1xf32>
    %222 = vector.broadcast %221 : vector<16x1xf32> to vector<16x32xf32>
    %223 = arith.mulf %218, %222 : vector<16x32xf32>
    %224 = vector.broadcast %203 : vector<1x32xf32> to vector<16x32xf32>
    %225 = arith.mulf %223, %224 : vector<16x32xf32>
    %226 = vector.broadcast %205 : vector<1x32xf32> to vector<16x32xf32>
    %227 = arith.addf %225, %226 : vector<16x32xf32>
    %c1 = arith.constant 1 : index
    %c0_98 = arith.constant 0 : index
    %c0_99 = arith.constant 0 : index
    %228 = vector.load %arg0[%c1, %c0_98, %c0_99] : memref<2x16x32xf32, #tpu.memory_space<vmem>>, vector<1x16x32xf32>
    %229 = vector.shape_cast %228 : vector<1x16x32xf32> to vector<16x32xf32>
    %230 = arith.truncf %229 : vector<16x32xf32> to vector<16x32xbf16>
    %c1_100 = arith.constant 1 : index
    %c0_101 = arith.constant 0 : index
    %c0_102 = arith.constant 0 : index
    %231 = vector.load %arg2[%c1_100, %c0_101, %c0_102] : memref<2x32x32xbf16, #tpu.memory_space<vmem>>, vector<1x32x32xbf16>
    %232 = vector.shape_cast %231 : vector<1x32x32xbf16> to vector<32x32xbf16>
    %cst_103 = arith.constant dense<0.000000e+00> : vector<16x32xf32>
    %233 = tpu.matmul %230, %232, %cst_103 {dimension_numbers = #tpu.dot_dimension_numbers<[1], [0], [0], [1], [0, 0, 1, 1], [], []>} : vector<16x32xbf16>, vector<32x32xbf16>, vector<16x32xf32> -> vector<16x32xf32>
    %c1_104 = arith.constant 1 : index
    %c0_105 = arith.constant 0 : index
    %c0_106 = arith.constant 0 : index
    %234 = vector.load %arg3[%c1_104, %c0_105, %c0_106] : memref<2x1x32xf32, #tpu.memory_space<vmem>>, vector<1x1x32xf32>
    %235 = vector.shape_cast %234 : vector<1x1x32xf32> to vector<1x32xf32>
    %236 = vector.broadcast %235 : vector<1x32xf32> to vector<16x32xf32>
    %237 = arith.addf %233, %236 : vector<16x32xf32>
    %c1_107 = arith.constant 1 : index
    %c0_108 = arith.constant 0 : index
    %c0_109 = arith.constant 0 : index
    %238 = vector.load %arg4[%c1_107, %c0_108, %c0_109] : memref<2x32x32xbf16, #tpu.memory_space<vmem>>, vector<1x32x32xbf16>
    %239 = vector.shape_cast %238 : vector<1x32x32xbf16> to vector<32x32xbf16>
    %cst_110 = arith.constant dense<0.000000e+00> : vector<16x32xf32>
    %240 = tpu.matmul %230, %239, %cst_110 {dimension_numbers = #tpu.dot_dimension_numbers<[1], [0], [0], [1], [0, 0, 1, 1], [], []>} : vector<16x32xbf16>, vector<32x32xbf16>, vector<16x32xf32> -> vector<16x32xf32>
    %c1_111 = arith.constant 1 : index
    %c0_112 = arith.constant 0 : index
    %c0_113 = arith.constant 0 : index
    %241 = vector.load %arg5[%c1_111, %c0_112, %c0_113] : memref<2x1x32xf32, #tpu.memory_space<vmem>>, vector<1x1x32xf32>
    %242 = vector.shape_cast %241 : vector<1x1x32xf32> to vector<1x32xf32>
    %243 = vector.broadcast %242 : vector<1x32xf32> to vector<16x32xf32>
    %244 = arith.addf %240, %243 : vector<16x32xf32>
    %c1_114 = arith.constant 1 : index
    %c0_115 = arith.constant 0 : index
    %c0_116 = arith.constant 0 : index
    %245 = vector.load %arg6[%c1_114, %c0_115, %c0_116] : memref<2x32x32xbf16, #tpu.memory_space<vmem>>, vector<1x32x32xbf16>
    %246 = vector.shape_cast %245 : vector<1x32x32xbf16> to vector<32x32xbf16>
    %cst_117 = arith.constant dense<0.000000e+00> : vector<16x32xf32>
    %247 = tpu.matmul %230, %246, %cst_117 {dimension_numbers = #tpu.dot_dimension_numbers<[1], [0], [0], [1], [0, 0, 1, 1], [], []>} : vector<16x32xbf16>, vector<32x32xbf16>, vector<16x32xf32> -> vector<16x32xf32>
    %c1_118 = arith.constant 1 : index
    %c0_119 = arith.constant 0 : index
    %c0_120 = arith.constant 0 : index
    %248 = vector.load %arg7[%c1_118, %c0_119, %c0_120] : memref<2x1x32xf32, #tpu.memory_space<vmem>>, vector<1x1x32xf32>
    %249 = vector.shape_cast %248 : vector<1x1x32xf32> to vector<1x32xf32>
    %250 = vector.broadcast %249 : vector<1x32xf32> to vector<16x32xf32>
    %251 = arith.addf %247, %250 : vector<16x32xf32>
    %252 = arith.truncf %237 : vector<16x32xf32> to vector<16x32xbf16>
    %253 = arith.truncf %244 : vector<16x32xf32> to vector<16x32xbf16>
    %254 = arith.truncf %251 : vector<16x32xf32> to vector<16x32xbf16>
    %cst_121 = arith.constant 0.000000e+00 : f32
    %255 = vector.broadcast %cst_121 : f32 to vector<16x32xf32>
    %256 = vector.broadcast %10 : vector<1x32xbf16> to vector<16x32xbf16>
    %257 = arith.mulf %253, %256 : vector<16x32xbf16>
    %cst_122 = arith.constant dense<0.000000e+00> : vector<16x16xf32>
    %258 = tpu.matmul %252, %257, %cst_122 {dimension_numbers = #tpu.dot_dimension_numbers<[1], [1], [0], [0], [0, 0, 1, 0], [], []>} : vector<16x32xbf16>, vector<16x32xbf16>, vector<16x16xf32> -> vector<16x16xf32>
    %259 = arith.addf %258, %0 : vector<16x16xf32>
    %cst_123 = arith.constant dense<0xFF800000> : vector<16xf32>
    %260 = vector.multi_reduction <maximumf>, %259, %cst_123 [1] : vector<16x16xf32> to vector<16xf32>
    %261 = vector.shape_cast %260 : vector<16xf32> to vector<16x1xf32>
    %262 = vector.broadcast %261 : vector<16x1xf32> to vector<16x16xf32>
    %263 = arith.subf %259, %262 : vector<16x16xf32>
    %264 = math.exp %263 : vector<16x16xf32>
    %cst_124 = arith.constant dense<0.000000e+00> : vector<16xf32>
    %265 = vector.multi_reduction <add>, %264, %cst_124 [1] : vector<16x16xf32> to vector<16xf32>
    %266 = vector.shape_cast %265 : vector<16xf32> to vector<16x1xf32>
    %267 = tpu.reciprocal %266 {approx = true} : vector<16x1xf32> -> vector<16x1xf32>
    %268 = vector.broadcast %267 : vector<16x1xf32> to vector<16x16xf32>
    %269 = arith.mulf %264, %268 : vector<16x16xf32>
    %270 = arith.truncf %269 : vector<16x16xf32> to vector<16x16xbf16>
    %271 = vector.broadcast %10 : vector<1x32xbf16> to vector<16x32xbf16>
    %272 = arith.mulf %254, %271 : vector<16x32xbf16>
    %cst_125 = arith.constant dense<0.000000e+00> : vector<16x32xf32>
    %273 = tpu.matmul %270, %272, %cst_125 {dimension_numbers = #tpu.dot_dimension_numbers<[1], [0], [0], [1], [0, 0, 1, 1], [], []>} : vector<16x16xbf16>, vector<16x32xbf16>, vector<16x32xf32> -> vector<16x32xf32>
    %274 = arith.addf %255, %273 : vector<16x32xf32>
    %275 = vector.broadcast %19 : vector<1x32xbf16> to vector<16x32xbf16>
    %276 = arith.mulf %253, %275 : vector<16x32xbf16>
    %cst_126 = arith.constant dense<0.000000e+00> : vector<16x16xf32>
    %277 = tpu.matmul %252, %276, %cst_126 {dimension_numbers = #tpu.dot_dimension_numbers<[1], [1], [0], [0], [0, 0, 1, 0], [], []>} : vector<16x32xbf16>, vector<16x32xbf16>, vector<16x16xf32> -> vector<16x16xf32>
    %278 = arith.addf %277, %0 : vector<16x16xf32>
    %cst_127 = arith.constant dense<0xFF800000> : vector<16xf32>
    %279 = vector.multi_reduction <maximumf>, %278, %cst_127 [1] : vector<16x16xf32> to vector<16xf32>
    %280 = vector.shape_cast %279 : vector<16xf32> to vector<16x1xf32>
    %281 = vector.broadcast %280 : vector<16x1xf32> to vector<16x16xf32>
    %282 = arith.subf %278, %281 : vector<16x16xf32>
    %283 = math.exp %282 : vector<16x16xf32>
    %cst_128 = arith.constant dense<0.000000e+00> : vector<16xf32>
    %284 = vector.multi_reduction <add>, %283, %cst_128 [1] : vector<16x16xf32> to vector<16xf32>
    %285 = vector.shape_cast %284 : vector<16xf32> to vector<16x1xf32>
    %286 = tpu.reciprocal %285 {approx = true} : vector<16x1xf32> -> vector<16x1xf32>
    %287 = vector.broadcast %286 : vector<16x1xf32> to vector<16x16xf32>
    %288 = arith.mulf %283, %287 : vector<16x16xf32>
    %289 = arith.truncf %288 : vector<16x16xf32> to vector<16x16xbf16>
    %290 = vector.broadcast %19 : vector<1x32xbf16> to vector<16x32xbf16>
    %291 = arith.mulf %254, %290 : vector<16x32xbf16>
    %cst_129 = arith.constant dense<0.000000e+00> : vector<16x32xf32>
    %292 = tpu.matmul %289, %291, %cst_129 {dimension_numbers = #tpu.dot_dimension_numbers<[1], [0], [0], [1], [0, 0, 1, 1], [], []>} : vector<16x16xbf16>, vector<16x32xbf16>, vector<16x32xf32> -> vector<16x32xf32>
    %293 = arith.addf %274, %292 : vector<16x32xf32>
    %294 = vector.broadcast %28 : vector<1x32xbf16> to vector<16x32xbf16>
    %295 = arith.mulf %253, %294 : vector<16x32xbf16>
    %cst_130 = arith.constant dense<0.000000e+00> : vector<16x16xf32>
    %296 = tpu.matmul %252, %295, %cst_130 {dimension_numbers = #tpu.dot_dimension_numbers<[1], [1], [0], [0], [0, 0, 1, 0], [], []>} : vector<16x32xbf16>, vector<16x32xbf16>, vector<16x16xf32> -> vector<16x16xf32>
    %297 = arith.addf %296, %0 : vector<16x16xf32>
    %cst_131 = arith.constant dense<0xFF800000> : vector<16xf32>
    %298 = vector.multi_reduction <maximumf>, %297, %cst_131 [1] : vector<16x16xf32> to vector<16xf32>
    %299 = vector.shape_cast %298 : vector<16xf32> to vector<16x1xf32>
    %300 = vector.broadcast %299 : vector<16x1xf32> to vector<16x16xf32>
    %301 = arith.subf %297, %300 : vector<16x16xf32>
    %302 = math.exp %301 : vector<16x16xf32>
    %cst_132 = arith.constant dense<0.000000e+00> : vector<16xf32>
    %303 = vector.multi_reduction <add>, %302, %cst_132 [1] : vector<16x16xf32> to vector<16xf32>
    %304 = vector.shape_cast %303 : vector<16xf32> to vector<16x1xf32>
    %305 = tpu.reciprocal %304 {approx = true} : vector<16x1xf32> -> vector<16x1xf32>
    %306 = vector.broadcast %305 : vector<16x1xf32> to vector<16x16xf32>
    %307 = arith.mulf %302, %306 : vector<16x16xf32>
    %308 = arith.truncf %307 : vector<16x16xf32> to vector<16x16xbf16>
    %309 = vector.broadcast %28 : vector<1x32xbf16> to vector<16x32xbf16>
    %310 = arith.mulf %254, %309 : vector<16x32xbf16>
    %cst_133 = arith.constant dense<0.000000e+00> : vector<16x32xf32>
    %311 = tpu.matmul %308, %310, %cst_133 {dimension_numbers = #tpu.dot_dimension_numbers<[1], [0], [0], [1], [0, 0, 1, 1], [], []>} : vector<16x16xbf16>, vector<16x32xbf16>, vector<16x32xf32> -> vector<16x32xf32>
    %312 = arith.addf %293, %311 : vector<16x32xf32>
    %313 = vector.broadcast %37 : vector<1x32xbf16> to vector<16x32xbf16>
    %314 = arith.mulf %253, %313 : vector<16x32xbf16>
    %cst_134 = arith.constant dense<0.000000e+00> : vector<16x16xf32>
    %315 = tpu.matmul %252, %314, %cst_134 {dimension_numbers = #tpu.dot_dimension_numbers<[1], [1], [0], [0], [0, 0, 1, 0], [], []>} : vector<16x32xbf16>, vector<16x32xbf16>, vector<16x16xf32> -> vector<16x16xf32>
    %316 = arith.addf %315, %0 : vector<16x16xf32>
    %cst_135 = arith.constant dense<0xFF800000> : vector<16xf32>
    %317 = vector.multi_reduction <maximumf>, %316, %cst_135 [1] : vector<16x16xf32> to vector<16xf32>
    %318 = vector.shape_cast %317 : vector<16xf32> to vector<16x1xf32>
    %319 = vector.broadcast %318 : vector<16x1xf32> to vector<16x16xf32>
    %320 = arith.subf %316, %319 : vector<16x16xf32>
    %321 = math.exp %320 : vector<16x16xf32>
    %cst_136 = arith.constant dense<0.000000e+00> : vector<16xf32>
    %322 = vector.multi_reduction <add>, %321, %cst_136 [1] : vector<16x16xf32> to vector<16xf32>
    %323 = vector.shape_cast %322 : vector<16xf32> to vector<16x1xf32>
    %324 = tpu.reciprocal %323 {approx = true} : vector<16x1xf32> -> vector<16x1xf32>
    %325 = vector.broadcast %324 : vector<16x1xf32> to vector<16x16xf32>
    %326 = arith.mulf %321, %325 : vector<16x16xf32>
    %327 = arith.truncf %326 : vector<16x16xf32> to vector<16x16xbf16>
    %328 = vector.broadcast %37 : vector<1x32xbf16> to vector<16x32xbf16>
    %329 = arith.mulf %254, %328 : vector<16x32xbf16>
    %cst_137 = arith.constant dense<0.000000e+00> : vector<16x32xf32>
    %330 = tpu.matmul %327, %329, %cst_137 {dimension_numbers = #tpu.dot_dimension_numbers<[1], [0], [0], [1], [0, 0, 1, 1], [], []>} : vector<16x16xbf16>, vector<16x32xbf16>, vector<16x32xf32> -> vector<16x32xf32>
    %331 = arith.addf %312, %330 : vector<16x32xf32>
    %332 = arith.truncf %331 : vector<16x32xf32> to vector<16x32xbf16>
    %c1_138 = arith.constant 1 : index
    %c0_139 = arith.constant 0 : index
    %c0_140 = arith.constant 0 : index
    %333 = vector.load %arg8[%c1_138, %c0_139, %c0_140] : memref<2x32x32xbf16, #tpu.memory_space<vmem>>, vector<1x32x32xbf16>
    %334 = vector.shape_cast %333 : vector<1x32x32xbf16> to vector<32x32xbf16>
    %cst_141 = arith.constant dense<0.000000e+00> : vector<16x32xf32>
    %335 = tpu.matmul %332, %334, %cst_141 {dimension_numbers = #tpu.dot_dimension_numbers<[1], [0], [0], [1], [0, 0, 1, 1], [], []>} : vector<16x32xbf16>, vector<32x32xbf16>, vector<16x32xf32> -> vector<16x32xf32>
    %c1_142 = arith.constant 1 : index
    %c0_143 = arith.constant 0 : index
    %c0_144 = arith.constant 0 : index
    %336 = vector.load %arg9[%c1_142, %c0_143, %c0_144] : memref<2x1x32xf32, #tpu.memory_space<vmem>>, vector<1x1x32xf32>
    %337 = vector.shape_cast %336 : vector<1x1x32xf32> to vector<1x32xf32>
    %338 = vector.broadcast %337 : vector<1x32xf32> to vector<16x32xf32>
    %339 = arith.addf %335, %338 : vector<16x32xf32>
    %340 = arith.addf %229, %339 : vector<16x32xf32>
    %c1_145 = arith.constant 1 : index
    %c0_146 = arith.constant 0 : index
    %c0_147 = arith.constant 0 : index
    %341 = vector.load %arg10[%c1_145, %c0_146, %c0_147] : memref<2x1x32xf32, #tpu.memory_space<vmem>>, vector<1x1x32xf32>
    %342 = vector.shape_cast %341 : vector<1x1x32xf32> to vector<1x32xf32>
    %c1_148 = arith.constant 1 : index
    %c0_149 = arith.constant 0 : index
    %c0_150 = arith.constant 0 : index
    %343 = vector.load %arg11[%c1_148, %c0_149, %c0_150] : memref<2x1x32xf32, #tpu.memory_space<vmem>>, vector<1x1x32xf32>
    %344 = vector.shape_cast %343 : vector<1x1x32xf32> to vector<1x32xf32>
    %cst_151 = arith.constant dense<0.000000e+00> : vector<16xf32>
    %345 = vector.multi_reduction <add>, %340, %cst_151 [1] : vector<16x32xf32> to vector<16xf32>
    %346 = vector.shape_cast %345 : vector<16xf32> to vector<16x1xf32>
    %cst_152 = arith.constant 3.200000e+01 : f32
    %347 = vector.broadcast %cst_152 : f32 to vector<16x1xf32>
    %348 = arith.divf %346, %347 : vector<16x1xf32>
    %349 = vector.broadcast %348 : vector<16x1xf32> to vector<16x32xf32>
    %350 = arith.subf %340, %349 : vector<16x32xf32>
    %351 = arith.mulf %350, %350 : vector<16x32xf32>
    %cst_153 = arith.constant dense<0.000000e+00> : vector<16xf32>
    %352 = vector.multi_reduction <add>, %351, %cst_153 [1] : vector<16x32xf32> to vector<16xf32>
    %353 = vector.shape_cast %352 : vector<16xf32> to vector<16x1xf32>
    %cst_154 = arith.constant 3.200000e+01 : f32
    %354 = vector.broadcast %cst_154 : f32 to vector<16x1xf32>
    %355 = arith.divf %353, %354 : vector<16x1xf32>
    %356 = vector.broadcast %348 : vector<16x1xf32> to vector<16x32xf32>
    %357 = arith.subf %340, %356 : vector<16x32xf32>
    %cst_155 = arith.constant 9.99999996E-13 : f32
    %358 = vector.broadcast %cst_155 : f32 to vector<16x1xf32>
    %359 = arith.addf %355, %358 : vector<16x1xf32>
    %360 = math.rsqrt %359 : vector<16x1xf32>
    %361 = vector.broadcast %360 : vector<16x1xf32> to vector<16x32xf32>
    %362 = arith.mulf %357, %361 : vector<16x32xf32>
    %363 = vector.broadcast %342 : vector<1x32xf32> to vector<16x32xf32>
    %364 = arith.mulf %362, %363 : vector<16x32xf32>
    %365 = vector.broadcast %344 : vector<1x32xf32> to vector<16x32xf32>
    %366 = arith.addf %364, %365 : vector<16x32xf32>
    %367 = arith.truncf %366 : vector<16x32xf32> to vector<16x32xbf16>
    %c1_156 = arith.constant 1 : index
    %c0_157 = arith.constant 0 : index
    %c0_158 = arith.constant 0 : index
    %368 = vector.load %arg12[%c1_156, %c0_157, %c0_158] : memref<2x32x64xbf16, #tpu.memory_space<vmem>>, vector<1x32x64xbf16>
    %369 = vector.shape_cast %368 : vector<1x32x64xbf16> to vector<32x64xbf16>
    %cst_159 = arith.constant dense<0.000000e+00> : vector<16x64xf32>
    %370 = tpu.matmul %367, %369, %cst_159 {dimension_numbers = #tpu.dot_dimension_numbers<[1], [0], [0], [1], [0, 0, 1, 1], [], []>} : vector<16x32xbf16>, vector<32x64xbf16>, vector<16x64xf32> -> vector<16x64xf32>
    %c1_160 = arith.constant 1 : index
    %c0_161 = arith.constant 0 : index
    %c0_162 = arith.constant 0 : index
    %371 = vector.load %arg13[%c1_160, %c0_161, %c0_162] : memref<2x1x64xf32, #tpu.memory_space<vmem>>, vector<1x1x64xf32>
    %372 = vector.shape_cast %371 : vector<1x1x64xf32> to vector<1x64xf32>
    %373 = vector.broadcast %372 : vector<1x64xf32> to vector<16x64xf32>
    %374 = arith.addf %370, %373 : vector<16x64xf32>
    %cst_163 = arith.constant 5.000000e-01 : f32
    %375 = vector.broadcast %cst_163 : f32 to vector<16x64xf32>
    %376 = arith.mulf %374, %375 : vector<16x64xf32>
    %cst_164 = arith.constant 0.707106769 : f32
    %377 = vector.broadcast %cst_164 : f32 to vector<16x64xf32>
    %378 = arith.mulf %374, %377 : vector<16x64xf32>
    %379 = math.erf %378 : vector<16x64xf32>
    %cst_165 = arith.constant 1.000000e+00 : f32
    %380 = vector.broadcast %cst_165 : f32 to vector<16x64xf32>
    %381 = arith.addf %380, %379 : vector<16x64xf32>
    %382 = arith.mulf %376, %381 : vector<16x64xf32>
    %383 = arith.truncf %382 : vector<16x64xf32> to vector<16x64xbf16>
    %c1_166 = arith.constant 1 : index
    %c0_167 = arith.constant 0 : index
    %c0_168 = arith.constant 0 : index
    %384 = vector.load %arg14[%c1_166, %c0_167, %c0_168] : memref<2x64x32xbf16, #tpu.memory_space<vmem>>, vector<1x64x32xbf16>
    %385 = vector.shape_cast %384 : vector<1x64x32xbf16> to vector<64x32xbf16>
    %cst_169 = arith.constant dense<0.000000e+00> : vector<16x32xf32>
    %386 = tpu.matmul %383, %385, %cst_169 {dimension_numbers = #tpu.dot_dimension_numbers<[1], [0], [0], [1], [0, 0, 1, 1], [], []>} : vector<16x64xbf16>, vector<64x32xbf16>, vector<16x32xf32> -> vector<16x32xf32>
    %c1_170 = arith.constant 1 : index
    %c0_171 = arith.constant 0 : index
    %c0_172 = arith.constant 0 : index
    %387 = vector.load %arg15[%c1_170, %c0_171, %c0_172] : memref<2x1x32xf32, #tpu.memory_space<vmem>>, vector<1x1x32xf32>
    %388 = vector.shape_cast %387 : vector<1x1x32xf32> to vector<1x32xf32>
    %389 = vector.broadcast %388 : vector<1x32xf32> to vector<16x32xf32>
    %390 = arith.addf %386, %389 : vector<16x32xf32>
    %391 = arith.addf %366, %390 : vector<16x32xf32>
    %c1_173 = arith.constant 1 : index
    %c0_174 = arith.constant 0 : index
    %c0_175 = arith.constant 0 : index
    %392 = vector.load %arg16[%c1_173, %c0_174, %c0_175] : memref<2x1x32xf32, #tpu.memory_space<vmem>>, vector<1x1x32xf32>
    %393 = vector.shape_cast %392 : vector<1x1x32xf32> to vector<1x32xf32>
    %c1_176 = arith.constant 1 : index
    %c0_177 = arith.constant 0 : index
    %c0_178 = arith.constant 0 : index
    %394 = vector.load %arg17[%c1_176, %c0_177, %c0_178] : memref<2x1x32xf32, #tpu.memory_space<vmem>>, vector<1x1x32xf32>
    %395 = vector.shape_cast %394 : vector<1x1x32xf32> to vector<1x32xf32>
    %cst_179 = arith.constant dense<0.000000e+00> : vector<16xf32>
    %396 = vector.multi_reduction <add>, %391, %cst_179 [1] : vector<16x32xf32> to vector<16xf32>
    %397 = vector.shape_cast %396 : vector<16xf32> to vector<16x1xf32>
    %cst_180 = arith.constant 3.200000e+01 : f32
    %398 = vector.broadcast %cst_180 : f32 to vector<16x1xf32>
    %399 = arith.divf %397, %398 : vector<16x1xf32>
    %400 = vector.broadcast %399 : vector<16x1xf32> to vector<16x32xf32>
    %401 = arith.subf %391, %400 : vector<16x32xf32>
    %402 = arith.mulf %401, %401 : vector<16x32xf32>
    %cst_181 = arith.constant dense<0.000000e+00> : vector<16xf32>
    %403 = vector.multi_reduction <add>, %402, %cst_181 [1] : vector<16x32xf32> to vector<16xf32>
    %404 = vector.shape_cast %403 : vector<16xf32> to vector<16x1xf32>
    %cst_182 = arith.constant 3.200000e+01 : f32
    %405 = vector.broadcast %cst_182 : f32 to vector<16x1xf32>
    %406 = arith.divf %404, %405 : vector<16x1xf32>
    %407 = vector.broadcast %399 : vector<16x1xf32> to vector<16x32xf32>
    %408 = arith.subf %391, %407 : vector<16x32xf32>
    %cst_183 = arith.constant 9.99999996E-13 : f32
    %409 = vector.broadcast %cst_183 : f32 to vector<16x1xf32>
    %410 = arith.addf %406, %409 : vector<16x1xf32>
    %411 = math.rsqrt %410 : vector<16x1xf32>
    %412 = vector.broadcast %411 : vector<16x1xf32> to vector<16x32xf32>
    %413 = arith.mulf %408, %412 : vector<16x32xf32>
    %414 = vector.broadcast %393 : vector<1x32xf32> to vector<16x32xf32>
    %415 = arith.mulf %413, %414 : vector<16x32xf32>
    %416 = vector.broadcast %395 : vector<1x32xf32> to vector<16x32xf32>
    %417 = arith.addf %415, %416 : vector<16x32xf32>
    %418 = arith.addf %227, %417 : vector<16x32xf32>
    %cst_184 = arith.constant 5.000000e-01 : f32
    %419 = vector.broadcast %cst_184 : f32 to vector<16x32xf32>
    %420 = arith.mulf %418, %419 : vector<16x32xf32>
    %c0_185 = arith.constant 0 : index
    %c0_186 = arith.constant 0 : index
    %421 = vector.load %arg18[%c0_185, %c0_186] : memref<16x32xf32, #tpu.memory_space<vmem>>, vector<16x32xf32>
    tpu.vector_store %arg18[%c0_185, %c0_186], %420 {strides = array<i32>} : memref<16x32xf32, #tpu.memory_space<vmem>>, vector<16x32xf32>,
    return
  }
}

</mosaic_0001>

<llo_original>
// kernel: tpu_custom_call.1
$region0: #{tpu_custom_call.1}
  #allocation0 [shape = 'u32[]', space=smem, size = 0x4, offset = 0x4, fixed_abs, tag = 'smem constant byte address 0x4 - core index']
  #allocation1 [shape = 'u32[144,128]{1,0:T(1,128)}', space=vmem, size = 0x12000, scoped, tag = 'internal scratch']
  %s0 = inlined_call_operand.vmem [shape: f32[2,16,32], index: 0, kind: input, shape index: {}]
  %s1 = inlined_call_operand.hbm [shape: f32[16,16], index: 1, kind: input, shape index: {}]
  %s2 = inlined_call_operand.vmem [shape: bf16[2,32,32], index: 2, kind: input, shape index: {}]
  %s3 = inlined_call_operand.vmem [shape: f32[2,1,32], index: 3, kind: input, shape index: {}]
  %s4 = inlined_call_operand.vmem [shape: bf16[2,32,32], index: 4, kind: input, shape index: {}]
  %s5 = inlined_call_operand.vmem [shape: f32[2,1,32], index: 5, kind: input, shape index: {}]
  %s6 = inlined_call_operand.hbm [shape: bf16[2,32,32], index: 6, kind: input, shape index: {}]
  %s7 = inlined_call_operand.vmem [shape: f32[2,1,32], index: 7, kind: input, shape index: {}]
  %s8 = inlined_call_operand.hbm [shape: bf16[2,32,32], index: 8, kind: input, shape index: {}]
  %s9 = inlined_call_operand.vmem [shape: f32[2,1,32], index: 9, kind: input, shape index: {}]
  %s10 = inlined_call_operand.vmem [shape: f32[2,1,32], index: 10, kind: input, shape index: {}]
  %s11 = inlined_call_operand.vmem [shape: f32[2,1,32], index: 11, kind: input, shape index: {}]
  %s12 = inlined_call_operand.hbm [shape: bf16[2,32,64], index: 12, kind: input, shape index: {}]
  %s13 = inlined_call_operand.vmem [shape: f32[2,1,64], index: 13, kind: input, shape index: {}]
  %s14 = inlined_call_operand.vmem [shape: bf16[2,64,32], index: 14, kind: input, shape index: {}]
  %s15 = inlined_call_operand.vmem [shape: f32[2,1,32], index: 15, kind: input, shape index: {}]
  %s16 = inlined_call_operand.vmem [shape: f32[2,1,32], index: 16, kind: input, shape index: {}]
  %s17 = inlined_call_operand.vmem [shape: f32[2,1,32], index: 17, kind: input, shape index: {}]
  %s18 = inlined_call_operand.hbm [shape: f32[16,32], index: 18, kind: output, shape index: {}]
  %s19 = sld [smem:[#allocation0]]
  $region98: #{tpu_custom_call.1} parent=0
    _
  %s21 = ssub.s32 1, %s19
  %s22 = scalar_select 0, %s21, %s19
  $region1: #{tpu_custom_call.1} parent=0
    #allocation2 [shape = 'u8[8192]{0}', space=vmem, size = 0x2000, scoped, tag = 'input window, operand 1, single buffered']
    #allocation3 [shape = 's32[1]{0}', space=sflag, size = 0x4, scoped, tag = 'scoped memory for tpu_custom_call.1']
    #allocation4 [shape = 's32[1]{0}', space=sflag, size = 0x4, scoped, tag = 'scoped memory for tpu_custom_call.1']
    #allocation5 [shape = 'u8[16384]{0}', space=vmem, size = 0x4000, scoped, tag = 'input window, operand 6, single buffered']
    #allocation6 [shape = 's32[1]{0}', space=sflag, size = 0x4, scoped, tag = 'scoped memory for tpu_custom_call.1']
    #allocation7 [shape = 'u8[16384]{0}', space=vmem, size = 0x4000, scoped, tag = 'input window, operand 8, single buffered']
    #allocation8 [shape = 'u8[16384]{0}', space=vmem, size = 0x4000, scoped, tag = 'input window, operand 12, single buffered']
    #allocation9 [shape = 's32[1]{0}', space=sflag, size = 0x4, scoped, tag = 'scoped memory for tpu_custom_call.1']
    #allocation10 [shape = 'u8[8192]{0}', space=vmem, size = 0x2000, scoped, tag = 'output window, operand 0, single buffered']
    %23 = vsyncpa [#allocation3], 0
    %24 = vsyncpa [#allocation6], 0
    %25 = vsyncpa [#allocation9], 0
    %26 = vsyncpa [#allocation4], 0
    // Predicated region
    $region2: #{tpu_custom_call.1} parent=1 // pred_check
      _
    $region3: #{tpu_custom_call.1} parent=1 // pred_check_branch
      %28 = sbr.rel (0) target = $region5
    $region4: #{tpu_custom_call.1} parent=1 // pred_region
      _
    $region5: #{tpu_custom_call.1} parent=1 // pred_fallthru
      _
    // Predicated region
    $region6: #{tpu_custom_call.1} parent=1 // pred_check
      _
    $region7: #{tpu_custom_call.1} parent=1 // pred_check_branch
      %30 = sbr.rel (0) target = $region9
    $region8: #{tpu_custom_call.1} parent=1 // pred_region
      %s32 = ssub.s32 256, 256
      %33 = vsyncadd [#allocation3], %s32
      %s34 = sshll.u32 [#allocation2], 4
      %s35 = int_to_ptr.vmem [resolvable:$true] %s34
      %40 = dma.hbm_to_vmem [thread:$0]  %s1, 256, %s35, [#allocation3], 128, 128, 8
    $region9: #{tpu_custom_call.1} parent=1 // pred_fallthru
      _
    // Predicated region
    $region10: #{tpu_custom_call.1} parent=1 // pred_check
      _
    $region11: #{tpu_custom_call.1} parent=1 // pred_check_branch
      %42 = sbr.rel (0) target = $region13
    $region12: #{tpu_custom_call.1} parent=1 // pred_region
      _
    $region13: #{tpu_custom_call.1} parent=1 // pred_fallthru
      _
    // Predicated region
    $region14: #{tpu_custom_call.1} parent=1 // pred_check
      _
    $region15: #{tpu_custom_call.1} parent=1 // pred_check_branch
      %44 = sbr.rel (0) target = $region17
    $region16: #{tpu_custom_call.1} parent=1 // pred_region
      _
    $region17: #{tpu_custom_call.1} parent=1 // pred_fallthru
      _
    // Predicated region
    $region18: #{tpu_custom_call.1} parent=1 // pred_check
      _
    $region19: #{tpu_custom_call.1} parent=1 // pred_check_branch
      %46 = sbr.rel (0) target = $region21
    $region20: #{tpu_custom_call.1} parent=1 // pred_region
      _
    $region21: #{tpu_custom_call.1} parent=1 // pred_fallthru
      _
    // Predicated region
    $region22: #{tpu_custom_call.1} parent=1 // pred_check
      _
    $region23: #{tpu_custom_call.1} parent=1 // pred_check_branch
      %48 = sbr.rel (0) target = $region25
    $region24: #{tpu_custom_call.1} parent=1 // pred_region
      _
    $region25: #{tpu_custom_call.1} parent=1 // pred_fallthru
      _
    // Predicated region
    $region26: #{tpu_custom_call.1} parent=1 // pred_check
      _
    $region27: #{tpu_custom_call.1} parent=1 // pred_check_branch
      %50 = sbr.rel (0) target = $region29
    $region28: #{tpu_custom_call.1} parent=1 // pred_region
      %s52 = ssub.s32 512, 512
      %53 = vsyncadd [#allocation6], %s52
      %s54 = sshll.u32 [#allocation5], 4
      %s55 = int_to_ptr.vmem [resolvable:$true] %s54
      %60 = dma.hbm_to_vmem [thread:$0]  %s6, 512, %s55, [#allocation6], 64, 64, 4
    $region29: #{tpu_custom_call.1} parent=1 // pred_fallthru
      _
    // Predicated region
    $region30: #{tpu_custom_call.1} parent=1 // pred_check
      _
    $region31: #{tpu_custom_call.1} parent=1 // pred_check_branch
      %62 = sbr.rel (0) target = $region33
    $region32: #{tpu_custom_call.1} parent=1 // pred_region
      _
    $region33: #{tpu_custom_call.1} parent=1 // pred_fallthru
      _
    // Predicated region
    $region34: #{tpu_custom_call.1} parent=1 // pred_check
      _
    $region35: #{tpu_custom_call.1} parent=1 // pred_check_branch
      %64 = sbr.rel (0) target = $region37
    $region36: #{tpu_custom_call.1} parent=1 // pred_region
      %s66 = ssub.s32 512, 512
      %67 = vsyncadd [#allocation6], %s66
      %s68 = sshll.u32 [#allocation7], 4
      %s69 = int_to_ptr.vmem [resolvable:$true] %s68
      %74 = dma.hbm_to_vmem [thread:$0]  %s8, 512, %s69, [#allocation6], 64, 64, 4
    $region37: #{tpu_custom_call.1} parent=1 // pred_fallthru
      _
    // Predicated region
    $region38: #{tpu_custom_call.1} parent=1 // pred_check
      _
    $region39: #{tpu_custom_call.1} parent=1 // pred_check_branch
      %76 = sbr.rel (0) target = $region41
    $region40: #{tpu_custom_call.1} parent=1 // pred_region
      _
    $region41: #{tpu_custom_call.1} parent=1 // pred_fallthru
      _
    // Predicated region
    $region42: #{tpu_custom_call.1} parent=1 // pred_check
      _
    $region43: #{tpu_custom_call.1} parent=1 // pred_check_branch
      %78 = sbr.rel (0) target = $region45
    $region44: #{tpu_custom_call.1} parent=1 // pred_region
      _
    $region45: #{tpu_custom_call.1} parent=1 // pred_fallthru
      _
    // Predicated region
    $region46: #{tpu_custom_call.1} parent=1 // pred_check
      _
    $region47: #{tpu_custom_call.1} parent=1 // pred_check_branch
      %80 = sbr.rel (0) target = $region49
    $region48: #{tpu_custom_call.1} parent=1 // pred_region
      _
    $region49: #{tpu_custom_call.1} parent=1 // pred_fallthru
      _
    // Predicated region
    $region50: #{tpu_custom_call.1} parent=1 // pred_check
      _
    $region51: #{tpu_custom_call.1} parent=1 // pred_check_branch
      %82 = sbr.rel (0) target = $region53
    $region52: #{tpu_custom_call.1} parent=1 // pred_region
      %s84 = ssub.s32 512, 512
      %85 = vsyncadd [#allocation9], %s84
      %s86 = sshll.u32 [#allocation8], 4
      %s87 = int_to_ptr.vmem [resolvable:$true] %s86
      %92 = dma.hbm_to_vmem [thread:$0]  %s12, 512, %s87, [#allocation9], 64, 64, 4
    $region53: #{tpu_custom_call.1} parent=1 // pred_fallthru
      _
    // Predicated region
    $region54: #{tpu_custom_call.1} parent=1 // pred_check
      _
    $region55: #{tpu_custom_call.1} parent=1 // pred_check_branch
      %94 = sbr.rel (0) target = $region57
    $region56: #{tpu_custom_call.1} parent=1 // pred_region
      _
    $region57: #{tpu_custom_call.1} parent=1 // pred_fallthru
      _
    // Predicated region
    $region58: #{tpu_custom_call.1} parent=1 // pred_check
      _
    $region59: #{tpu_custom_call.1} parent=1 // pred_check_branch
      %96 = sbr.rel (0) target = $region61
    $region60: #{tpu_custom_call.1} parent=1 // pred_region
      _
    $region61: #{tpu_custom_call.1} parent=1 // pred_fallthru
      _
    // Predicated region
    $region62: #{tpu_custom_call.1} parent=1 // pred_check
      _
    $region63: #{tpu_custom_call.1} parent=1 // pred_check_branch
      %98 = sbr.rel (0) target = $region65
    $region64: #{tpu_custom_call.1} parent=1 // pred_region
      _
    $region65: #{tpu_custom_call.1} parent=1 // pred_fallthru
      _
    // Predicated region
    $region66: #{tpu_custom_call.1} parent=1 // pred_check
      _
    $region67: #{tpu_custom_call.1} parent=1 // pred_check_branch
      %100 = sbr.rel (0) target = $region69
    $region68: #{tpu_custom_call.1} parent=1 // pred_region
      _
    $region69: #{tpu_custom_call.1} parent=1 // pred_fallthru
      _
    // Predicated region
    $region70: #{tpu_custom_call.1} parent=1 // pred_check
      _
    $region71: #{tpu_custom_call.1} parent=1 // pred_check_branch
      %102 = sbr.rel (0) target = $region73
    $region72: #{tpu_custom_call.1} parent=1 // pred_region
      _
    $region73: #{tpu_custom_call.1} parent=1 // pred_fallthru
      _
    // Predicated region
    $region74: #{tpu_custom_call.1} parent=1 // pred_check
      _
    $region75: #{tpu_custom_call.1} parent=1 // pred_check_branch
      %104 = sbr.rel (0) target = $region77
    $region76: #{tpu_custom_call.1} parent=1 // pred_region
      %105 = dma.done [#allocation3], 256
    $region77: #{tpu_custom_call.1} parent=1 // pred_fallthru
      _
    // Predicated region
    $region78: #{tpu_custom_call.1} parent=1 // pred_check
      _
    $region79: #{tpu_custom_call.1} parent=1 // pred_check_branch
      %107 = sbr.rel (0) target = $region81
    $region80: #{tpu_custom_call.1} parent=1 // pred_region
      %108 = dma.done [#allocation6], 512
    $region81: #{tpu_custom_call.1} parent=1 // pred_fallthru
      _
    // Predicated region
    $region82: #{tpu_custom_call.1} parent=1 // pred_check
      _
    $region83: #{tpu_custom_call.1} parent=1 // pred_check_branch
      %110 = sbr.rel (0) target = $region85
    $region84: #{tpu_custom_call.1} parent=1 // pred_region
      %111 = dma.done [#allocation6], 512
    $region85: #{tpu_custom_call.1} parent=1 // pred_fallthru
      _
    // Predicated region
    $region86: #{tpu_custom_call.1} parent=1 // pred_check
      _
    $region87: #{tpu_custom_call.1} parent=1 // pred_check_branch
      %113 = sbr.rel (0) target = $region89
    $region88: #{tpu_custom_call.1} parent=1 // pred_region
      %114 = dma.done [#allocation9], 512
    $region89: #{tpu_custom_call.1} parent=1 // pred_fallthru
      _
    %v116 = vld [vmem:[#allocation2] sm:$0xff]
    %v117 = vld [vmem:[#allocation2 + $0x8] sm:$0xff]
    %v118 = vlaneseq
    %v119 = vand.u32 %v118, 127
    %vm120 = vcmp.ge.s32.totalorder %v119, 0
    %vm121 = vcmp.lt.s32.totalorder %v119, 8
    %vm122 = vmand %vm120, %vm121
    %v123 = vsel %vm122, 1.0, 0.0
    %v124 = vpack.c.bf16 %v123, %v123
    %vm125 = vcmp.ge.s32.totalorder %v119, 8
    %vm126 = vcmp.lt.s32.totalorder %v119, 16
    %vm127 = vmand %vm125, %vm126
    %v128 = vsel %vm127, 1.0, 0.0
    %v129 = vpack.c.bf16 %v128, %v128
    %vm130 = vcmp.ge.s32.totalorder %v119, 16
    %vm131 = vcmp.lt.s32.totalorder %v119, 24
    %vm132 = vmand %vm130, %vm131
    %v133 = vsel %vm132, 1.0, 0.0
    %v134 = vpack.c.bf16 %v133, %v133
    %vm135 = vcmp.ge.s32.totalorder %v119, 24
    %vm136 = vcmp.lt.s32.totalorder %v119, 32
    %vm137 = vmand %vm135, %vm136
    %v138 = vsel %vm137, 1.0, 0.0
    %v139 = vpack.c.bf16 %v138, %v138
    %v140 = vld [vmem:[%s0] sm:$0xff]
    %v141 = vld [vmem:[%s0 + $0x8] sm:$0xff]
    %v142 = vpack.c.bf16 %v141, %v140
    %v143 = vld [vmem:[%s2] sm:$0xf]
    %v144 = vld [vmem:[%s2 + $0x4] sm:$0xf]
    %v145 = vld [vmem:[%s2 + $0x8] sm:$0xf]
    %v146 = vld [vmem:[%s2 + $0xc] sm:$0xf]
    %v147 = vld [vmem:[%s3] sm:$0x1]
    %v149 = vlaneseq
    %v150 = vshrl.u32 %v149, 7
    %v151 = vsub.s32 0, %v150
    %v152 = vrot.slane %v147, %v151
    %v158 = vunpack.c.l.b16 %v143
    %v159 = vunpack.c.l.b16 %v144
    %v160 = vunpack.c.l.b16 %v145
    %v161 = vunpack.c.l.b16 %v146
    %v162 = vpack.c.b16 %v159, %v158
    %v163 = vpack.c.b16 %v161, %v160
    %vm166 = vcmask 261120
    %v168 = vsel %vm166, %v142, 0
    %170 = vmatprep.subr.bf16.mxu0 0
    %171 = vmatpush1.bf16.msra.mxu0 0
    %172 = vmatprep.subr.bf16.mxu0 0
    %173 = vmatpush1.bf16.msra.mxu0 0
    %174 = vmatprep.subr.bf16.mxu0 0
    %175 = vmatpush1.bf16.msra.mxu0 0
    %176 = vmatprep.subr.bf16.mxu0 0
    %177 = vmatpush1.bf16.msra.mxu0 0
    %178 = vmatprep.subr.bf16.mxu0 0
    %179 = vmatpush1.bf16.msra.mxu0 0
    %180 = vmatprep.subr.bf16.mxu0 0
    %181 = vmatpush1.bf16.msra.mxu0 0
    %182 = vmatprep.subr.bf16.mxu0 0
    %183 = vmatpush1.bf16.msra.mxu0 %v163
    %184 = vmatprep.subr.bf16.mxu0 0
    %185 = vmatpush1.bf16.msra.mxu0 %v162
    %186 = vmatprep.subr.bf16.mxu0 0
    %187 = vmatpush2.bf16.msra.mxu0 0
    %188 = vmatprep.subr.bf16.mxu0 0
    %189 = vmatpush2.bf16.msra.mxu0 0
    %190 = vmatprep.subr.bf16.mxu0 0
    %191 = vmatpush2.bf16.msra.mxu0 0
    %192 = vmatprep.subr.bf16.mxu0 0
    %193 = vmatpush2.bf16.msra.mxu0 0
    %194 = vmatprep.subr.bf16.mxu0 0
    %195 = vmatpush2.bf16.msra.mxu0 0
    %196 = vmatprep.subr.bf16.mxu0 0
    %197 = vmatpush2.bf16.msra.mxu0 0
    %198 = vmatprep.subr.bf16.mxu0 0
    %199 = vmatpush2.bf16.msra.mxu0 0
    %200 = vmatprep.subr.bf16.mxu0 0
    %201 = vmatpush2.bf16.msra.mxu0 0
    %202 = vmatprep.mubr.bf16.mxu0 0
    %203 = vmatmul.mubr.bf16.gmra.mxu0 %v168
    %v204 = vpop.f32.mrf.mxu0
    %v205 = vadd.f32 %v152, %v204
    %v206 = vpop.f32.mrf.mxu0
    %v207 = vpop.f32.mrf.mxu0
    %v208 = vadd.f32 %v152, %v207
    %v209 = vpop.f32.mrf.mxu0
    %210 = vdwg.mxu0
    %v211 = vld [vmem:[%s4] sm:$0xf]
    %v212 = vld [vmem:[%s4 + $0x4] sm:$0xf]
    %v213 = vld [vmem:[%s4 + $0x8] sm:$0xf]
    %v214 = vld [vmem:[%s4 + $0xc] sm:$0xf]
    %v215 = vld [vmem:[%s5] sm:$0x1]
    %v217 = vlaneseq
    %v218 = vshrl.u32 %v217, 7
    %v219 = vsub.s32 0, %v218
    %v220 = vrot.slane %v215, %v219
    %v226 = vunpack.c.l.b16 %v211
    %v227 = vunpack.c.l.b16 %v212
    %v228 = vunpack.c.l.b16 %v213
    %v229 = vunpack.c.l.b16 %v214
    %v230 = vpack.c.b16 %v227, %v226
    %v231 = vpack.c.b16 %v229, %v228
    %234 = vmatprep.subr.bf16.mxu0 0
    %235 = vmatpush1.bf16.msra.mxu0 0
    %236 = vmatprep.subr.bf16.mxu0 0
    %237 = vmatpush1.bf16.msra.mxu0 0
    %238 = vmatprep.subr.bf16.mxu0 0
    %239 = vmatpush1.bf16.msra.mxu0 0
    %240 = vmatprep.subr.bf16.mxu0 0
    %241 = vmatpush1.bf16.msra.mxu0 0
    %242 = vmatprep.subr.bf16.mxu0 0
    %243 = vmatpush1.bf16.msra.mxu0 0
    %244 = vmatprep.subr.bf16.mxu0 0
    %245 = vmatpush1.bf16.msra.mxu0 0
    %246 = vmatprep.subr.bf16.mxu0 0
    %247 = vmatpush1.bf16.msra.mxu0 %v231
    %248 = vmatprep.subr.bf16.mxu0 0
    %249 = vmatpush1.bf16.msra.mxu0 %v230
    %250 = vmatprep.subr.bf16.mxu0 0
    %251 = vmatpush2.bf16.msra.mxu0 0
    %252 = vmatprep.subr.bf16.mxu0 0
    %253 = vmatpush2.bf16.msra.mxu0 0
    %254 = vmatprep.subr.bf16.mxu0 0
    %255 = vmatpush2.bf16.msra.mxu0 0
    %256 = vmatprep.subr.bf16.mxu0 0
    %257 = vmatpush2.bf16.msra.mxu0 0
    %258 = vmatprep.subr.bf16.mxu0 0
    %259 = vmatpush2.bf16.msra.mxu0 0
    %260 = vmatprep.subr.bf16.mxu0 0
    %261 = vmatpush2.bf16.msra.mxu0 0
    %262 = vmatprep.subr.bf16.mxu0 0
    %263 = vmatpush2.bf16.msra.mxu0 0
    %264 = vmatprep.subr.bf16.mxu0 0
    %265 = vmatpush2.bf16.msra.mxu0 0
    %266 = vmatprep.mubr.bf16.mxu0 0
    %267 = vmatmul.mubr.bf16.gmra.mxu0 %v168
    %v268 = vpop.f32.mrf.mxu0
    %v269 = vadd.f32 %v220, %v268
    %v270 = vpop.f32.mrf.mxu0
    %v271 = vpop.f32.mrf.mxu0
    %v272 = vadd.f32 %v220, %v271
    %v273 = vpop.f32.mrf.mxu0
    %274 = vdwg.mxu0
    %v275 = vld [vmem:[#allocation5] sm:$0xf]
    %v276 = vld [vmem:[#allocation5 + $0x4] sm:$0xf]
    %v277 = vld [vmem:[#allocation5 + $0x8] sm:$0xf]
    %v278 = vld [vmem:[#allocation5 + $0xc] sm:$0xf]
    %v279 = vld [vmem:[%s7] sm:$0x1]
    %v281 = vlaneseq
    %v282 = vshrl.u32 %v281, 7
    %v283 = vsub.s32 0, %v282
    %v284 = vrot.slane %v279, %v283
    %v290 = vunpack.c.l.b16 %v275
    %v291 = vunpack.c.l.b16 %v276
    %v292 = vunpack.c.l.b16 %v277
    %v293 = vunpack.c.l.b16 %v278
    %v294 = vpack.c.b16 %v291, %v290
    %v295 = vpack.c.b16 %v293, %v292
    %298 = vmatprep.subr.bf16.mxu0 0
    %299 = vmatpush1.bf16.msra.mxu0 0
    %300 = vmatprep.subr.bf16.mxu0 0
    %301 = vmatpush1.bf16.msra.mxu0 0
    %302 = vmatprep.subr.bf16.mxu0 0
    %303 = vmatpush1.bf16.msra.mxu0 0
    %304 = vmatprep.subr.bf16.mxu0 0
    %305 = vmatpush1.bf16.msra.mxu0 0
    %306 = vmatprep.subr.bf16.mxu0 0
    %307 = vmatpush1.bf16.msra.mxu0 0
    %308 = vmatprep.subr.bf16.mxu0 0
    %309 = vmatpush1.bf16.msra.mxu0 0
    %310 = vmatprep.subr.bf16.mxu0 0
    %311 = vmatpush1.bf16.msra.mxu0 %v295
    %312 = vmatprep.subr.bf16.mxu0 0
    %313 = vmatpush1.bf16.msra.mxu0 %v294
    %314 = vmatprep.subr.bf16.mxu0 0
    %315 = vmatpush2.bf16.msra.mxu0 0
    %316 = vmatprep.subr.bf16.mxu0 0
    %317 = vmatpush2.bf16.msra.mxu0 0
    %318 = vmatprep.subr.bf16.mxu0 0
    %319 = vmatpush2.bf16.msra.mxu0 0
    %320 = vmatprep.subr.bf16.mxu0 0
    %321 = vmatpush2.bf16.msra.mxu0 0
    %322 = vmatprep.subr.bf16.mxu0 0
    %323 = vmatpush2.bf16.msra.mxu0 0
    %324 = vmatprep.subr.bf16.mxu0 0
    %325 = vmatpush2.bf16.msra.mxu0 0
    %326 = vmatprep.subr.bf16.mxu0 0
    %327 = vmatpush2.bf16.msra.mxu0 0
    %328 = vmatprep.subr.bf16.mxu0 0
    %329 = vmatpush2.bf16.msra.mxu0 0
    %330 = vmatprep.mubr.bf16.mxu0 0
    %331 = vmatmul.mubr.bf16.gmra.mxu0 %v168
    %v332 = vpop.f32.mrf.mxu0
    %v333 = vadd.f32 %v284, %v332
    %v334 = vpop.f32.mrf.mxu0
    %v335 = vpop.f32.mrf.mxu0
    %v336 = vadd.f32 %v284, %v335
    %v337 = vpop.f32.mrf.mxu0
    %338 = vdwg.mxu0
    %v339 = vpack.c.bf16 %v208, %v205
    %v340 = vpack.c.bf16 %v272, %v269
    %v341 = vpack.c.bf16 %v336, %v333
    %v342 = vmul.bf16 %v340, %v124
    %v344 = vsel %vm166, %v339, 0
    %v347 = vsel %vm166, %v342, 0
    %349 = vmatprep.subr.bf16.mxu0 0
    %350 = vmatpush1.bf16.xpose.msra.mxu0 0
    %351 = vmatprep.subr.bf16.mxu0 0
    %352 = vmatpush1.bf16.xpose.msra.mxu0 0
    %353 = vmatprep.subr.bf16.mxu0 0
    %354 = vmatpush1.bf16.xpose.msra.mxu0 0
    %355 = vmatprep.subr.bf16.mxu0 0
    %356 = vmatpush1.bf16.xpose.msra.mxu0 0
    %357 = vmatprep.subr.bf16.mxu0 0
    %358 = vmatpush1.bf16.xpose.msra.mxu0 0
    %359 = vmatprep.subr.bf16.mxu0 0
    %360 = vmatpush1.bf16.xpose.msra.mxu0 0
    %361 = vmatprep.subr.bf16.mxu0 0
    %362 = vmatpush1.bf16.xpose.msra.mxu0 0
    %363 = vmatprep.subr.bf16.mxu0 0
    %364 = vmatpush1.bf16.xpose.msra.mxu0 %v347
    %365 = vmatprep.subr.bf16.mxu0 0
    %366 = vmatpush2.bf16.xpose.msra.mxu0 0
    %367 = vmatprep.subr.bf16.mxu0 0
    %368 = vmatpush2.bf16.xpose.msra.mxu0 0
    %369 = vmatprep.subr.bf16.mxu0 0
    %370 = vmatpush2.bf16.xpose.msra.mxu0 0
    %371 = vmatprep.subr.bf16.mxu0 0
    %372 = vmatpush2.bf16.xpose.msra.mxu0 0
    %373 = vmatprep.subr.bf16.mxu0 0
    %374 = vmatpush2.bf16.xpose.msra.mxu0 0
    %375 = vmatprep.subr.bf16.mxu0 0
    %376 = vmatpush2.bf16.xpose.msra.mxu0 0
    %377 = vmatprep.subr.bf16.mxu0 0
    %378 = vmatpush2.bf16.xpose.msra.mxu0 0
    %379 = vmatprep.subr.bf16.mxu0 0
    %380 = vmatpush2.bf16.xpose.msra.mxu0 0
    %381 = vmatprep.mubr.bf16.mxu0 0
    %382 = vmatmul.mubr.bf16.gmra.mxu0 %v344
    %v383 = vpop.f32.mrf.mxu0
    %v384 = vadd.f32 %v116, %v383
    %v385 = vpop.f32.mrf.mxu0
    %v386 = vpop.f32.mrf.mxu0
    %v387 = vadd.f32 %v117, %v386
    %v388 = vpop.f32.mrf.mxu0
    %389 = vdwg.mxu0
    %vm390 = vcmask 130048
    %v391 = vsel %vm390, %v384, -inf
    %392 = vmax.xlane.f32.xlu0 %v391
    %v393 = vpop.xlane.xlu0 %392
    %v394 = vsel %vm390, %v387, -inf
    %395 = vmax.xlane.f32.xlu0 %v394
    %v396 = vpop.xlane.xlu0 %395
    %v397 = vsub.f32 %v384, %v393
    %v398 = vsub.f32 %v387, %v396
    %v399 = vmul.f32 %v397, 1.442695
    %v400 = vpow.pop %v399
    %v401 = vmul.f32 %v398, 1.442695
    %v402 = vpow.pop %v401
    %v403 = vsel %vm390, %v400, 0.0
    %404 = vadd.xlane.f32.xlu0 %v403
    %v405 = vpop.xlane.xlu0 %404
    %v406 = vsel %vm390, %v402, 0.0
    %407 = vadd.xlane.f32.xlu0 %v406
    %v408 = vpop.xlane.xlu0 %407
    %v409 = vrcp.pop %v405
    %v410 = vrcp.pop %v408
    %v411 = vmul.f32 %v400, %v409
    %v412 = vmul.f32 %v402, %v410
    %v413 = vpack.c.bf16 %v412, %v411
    %v414 = vmul.bf16 %v341, %v124
    %v415 = vmul.bf16 %v340, %v129
    %v417 = vsel %vm166, %v415, 0
    %419 = vmatprep.subr.bf16.mxu0 0
    %420 = vmatpush1.bf16.xpose.msra.mxu0 0
    %421 = vmatprep.subr.bf16.mxu0 0
    %422 = vmatpush1.bf16.xpose.msra.mxu0 0
    %423 = vmatprep.subr.bf16.mxu0 0
    %424 = vmatpush1.bf16.xpose.msra.mxu0 0
    %425 = vmatprep.subr.bf16.mxu0 0
    %426 = vmatpush1.bf16.xpose.msra.mxu0 0
    %427 = vmatprep.subr.bf16.mxu0 0
    %428 = vmatpush1.bf16.xpose.msra.mxu0 0
    %429 = vmatprep.subr.bf16.mxu0 0
    %430 = vmatpush1.bf16.xpose.msra.mxu0 0
    %431 = vmatprep.subr.bf16.mxu0 0
    %432 = vmatpush1.bf16.xpose.msra.mxu0 0
    %433 = vmatprep.subr.bf16.mxu0 0
    %434 = vmatpush1.bf16.xpose.msra.mxu0 %v417
    %435 = vmatprep.subr.bf16.mxu0 0
    %436 = vmatpush2.bf16.xpose.msra.mxu0 0
    %437 = vmatprep.subr.bf16.mxu0 0
    %438 = vmatpush2.bf16.xpose.msra.mxu0 0
    %439 = vmatprep.subr.bf16.mxu0 0
    %440 = vmatpush2.bf16.xpose.msra.mxu0 0
    %441 = vmatprep.subr.bf16.mxu0 0
    %442 = vmatpush2.bf16.xpose.msra.mxu0 0
    %443 = vmatprep.subr.bf16.mxu0 0
    %444 = vmatpush2.bf16.xpose.msra.mxu0 0
    %445 = vmatprep.subr.bf16.mxu0 0
    %446 = vmatpush2.bf16.xpose.msra.mxu0 0
    %447 = vmatprep.subr.bf16.mxu0 0
    %448 = vmatpush2.bf16.xpose.msra.mxu0 0
    %449 = vmatprep.subr.bf16.mxu0 0
    %450 = vmatpush2.bf16.xpose.msra.mxu0 0
    %451 = vmatprep.mubr.bf16.mxu0 0
    %452 = vmatmul.mubr.bf16.gmra.mxu0 %v344
    %v453 = vpop.f32.mrf.mxu0
    %v454 = vadd.f32 %v116, %v453
    %v455 = vpop.f32.mrf.mxu0
    %v456 = vpop.f32.mrf.mxu0
    %v457 = vadd.f32 %v117, %v456
    %v458 = vpop.f32.mrf.mxu0
    %459 = vdwg.mxu0
    %v460 = vsel %vm390, %v454, -inf
    %461 = vmax.xlane.f32.xlu0 %v460
    %v462 = vpop.xlane.xlu0 %461
    %v463 = vsel %vm390, %v457, -inf
    %464 = vmax.xlane.f32.xlu0 %v463
    %v465 = vpop.xlane.xlu0 %464
    %v466 = vsub.f32 %v454, %v462
    %v467 = vsub.f32 %v457, %v465
    %v468 = vmul.f32 %v466, 1.442695
    %v469 = vpow.pop %v468
    %v470 = vmul.f32 %v467, 1.442695
    %v471 = vpow.pop %v470
    %v472 = vsel %vm390, %v469, 0.0
    %473 = vadd.xlane.f32.xlu0 %v472
    %v474 = vpop.xlane.xlu0 %473
    %v475 = vsel %vm390, %v471, 0.0
    %476 = vadd.xlane.f32.xlu0 %v475
    %v477 = vpop.xlane.xlu0 %476
    %v478 = vrcp.pop %v474
    %v479 = vrcp.pop %v477
    %v480 = vmul.f32 %v469, %v478
    %v481 = vmul.f32 %v471, %v479
    %v482 = vpack.c.bf16 %v481, %v480
    %v483 = vmul.bf16 %v341, %v129
    %v485 = vsel %vm390, %v482, 0
    %487 = vmatprep.subr.bf16.mxu0 0
    %488 = vmatpush1.bf16.msra.mxu0 0
    %489 = vmatprep.subr.bf16.mxu0 0
    %490 = vmatpush1.bf16.msra.mxu0 0
    %491 = vmatprep.subr.bf16.mxu0 0
    %492 = vmatpush1.bf16.msra.mxu0 0
    %493 = vmatprep.subr.bf16.mxu0 0
    %494 = vmatpush1.bf16.msra.mxu0 0
    %495 = vmatprep.subr.bf16.mxu0 0
    %496 = vmatpush1.bf16.msra.mxu0 0
    %497 = vmatprep.subr.bf16.mxu0 0
    %498 = vmatpush1.bf16.msra.mxu0 0
    %499 = vmatprep.subr.bf16.mxu0 0
    %500 = vmatpush1.bf16.msra.mxu0 0
    %501 = vmatprep.subr.bf16.mxu0 0
    %502 = vmatpush1.bf16.msra.mxu0 %v483
    %503 = vmatprep.subr.bf16.mxu0 0
    %504 = vmatpush2.bf16.msra.mxu0 0
    %505 = vmatprep.subr.bf16.mxu0 0
    %506 = vmatpush2.bf16.msra.mxu0 0
    %507 = vmatprep.subr.bf16.mxu0 0
    %508 = vmatpush2.bf16.msra.mxu0 0
    %509 = vmatprep.subr.bf16.mxu0 0
    %510 = vmatpush2.bf16.msra.mxu0 0
    %511 = vmatprep.subr.bf16.mxu0 0
    %512 = vmatpush2.bf16.msra.mxu0 0
    %513 = vmatprep.subr.bf16.mxu0 0
    %514 = vmatpush2.bf16.msra.mxu0 0
    %515 = vmatprep.subr.bf16.mxu0 0
    %516 = vmatpush2.bf16.msra.mxu0 0
    %517 = vmatprep.subr.bf16.mxu0 0
    %518 = vmatpush2.bf16.msra.mxu0 0
    %519 = vmatprep.mubr.bf16.mxu0 0
    %520 = vmatmul.mubr.bf16.gmra.mxu0 %v485
    %v521 = vpop.f32.mrf.mxu0
    %v522 = vadd.f32 0.0, %v521
    %v523 = vpop.f32.mrf.mxu0
    %v524 = vpop.f32.mrf.mxu0
    %v525 = vadd.f32 0.0, %v524
    %v526 = vpop.f32.mrf.mxu0
    %527 = vdwg.mxu0
    %v529 = vsel %vm390, %v413, 0
    %531 = vmatprep.subr.bf16.mxu0 0
    %532 = vmatpush1.bf16.msra.mxu0 0
    %533 = vmatprep.subr.bf16.mxu0 0
    %534 = vmatpush1.bf16.msra.mxu0 0
    %535 = vmatprep.subr.bf16.mxu0 0
    %536 = vmatpush1.bf16.msra.mxu0 0
    %537 = vmatprep.subr.bf16.mxu0 0
    %538 = vmatpush1.bf16.msra.mxu0 0
    %539 = vmatprep.subr.bf16.mxu0 0
    %540 = vmatpush1.bf16.msra.mxu0 0
    %541 = vmatprep.subr.bf16.mxu0 0
    %542 = vmatpush1.bf16.msra.mxu0 0
    %543 = vmatprep.subr.bf16.mxu0 0
    %544 = vmatpush1.bf16.msra.mxu0 0
    %545 = vmatprep.subr.bf16.mxu0 0
    %546 = vmatpush1.bf16.msra.mxu0 %v414
    %547 = vmatprep.subr.bf16.mxu0 0
    %548 = vmatpush2.bf16.msra.mxu0 0
    %549 = vmatprep.subr.bf16.mxu0 0
    %550 = vmatpush2.bf16.msra.mxu0 0
    %551 = vmatprep.subr.bf16.mxu0 0
    %552 = vmatpush2.bf16.msra.mxu0 0
    %553 = vmatprep.subr.bf16.mxu0 0
    %554 = vmatpush2.bf16.msra.mxu0 0
    %555 = vmatprep.subr.bf16.mxu0 0
    %556 = vmatpush2.bf16.msra.mxu0 0
    %557 = vmatprep.subr.bf16.mxu0 0
    %558 = vmatpush2.bf16.msra.mxu0 0
    %559 = vmatprep.subr.bf16.mxu0 0
    %560 = vmatpush2.bf16.msra.mxu0 0
    %561 = vmatprep.subr.bf16.mxu0 0
    %562 = vmatpush2.bf16.msra.mxu0 0
    %563 = vmatprep.mubr.bf16.mxu0 0
    %564 = vmatmul.mubr.bf16.gmra.mxu0 %v529
    %v565 = vpop.f32.mrf.mxu0
    %v566 = vadd.f32 %v522, %v565
    %v567 = vpop.f32.mrf.mxu0
    %v568 = vpop.f32.mrf.mxu0
    %v569 = vadd.f32 %v525, %v568
    %v570 = vpop.f32.mrf.mxu0
    %571 = vdwg.mxu0
    %v572 = vmul.bf16 %v340, %v134
    %v574 = vsel %vm166, %v572, 0
    %576 = vmatprep.subr.bf16.mxu0 0
    %577 = vmatpush1.bf16.xpose.msra.mxu0 0
    %578 = vmatprep.subr.bf16.mxu0 0
    %579 = vmatpush1.bf16.xpose.msra.mxu0 0
    %580 = vmatprep.subr.bf16.mxu0 0
    %581 = vmatpush1.bf16.xpose.msra.mxu0 0
    %582 = vmatprep.subr.bf16.mxu0 0
    %583 = vmatpush1.bf16.xpose.msra.mxu0 0
    %584 = vmatprep.subr.bf16.mxu0 0
    %585 = vmatpush1.bf16.xpose.msra.mxu0 0
    %586 = vmatprep.subr.bf16.mxu0 0
    %587 = vmatpush1.bf16.xpose.msra.mxu0 0
    %588 = vmatprep.subr.bf16.mxu0 0
    %589 = vmatpush1.bf16.xpose.msra.mxu0 0
    %590 = vmatprep.subr.bf16.mxu0 0
    %591 = vmatpush1.bf16.xpose.msra.mxu0 %v574
    %592 = vmatprep.subr.bf16.mxu0 0
    %593 = vmatpush2.bf16.xpose.msra.mxu0 0
    %594 = vmatprep.subr.bf16.mxu0 0
    %595 = vmatpush2.bf16.xpose.msra.mxu0 0
    %596 = vmatprep.subr.bf16.mxu0 0
    %597 = vmatpush2.bf16.xpose.msra.mxu0 0
    %598 = vmatprep.subr.bf16.mxu0 0
    %599 = vmatpush2.bf16.xpose.msra.mxu0 0
    %600 = vmatprep.subr.bf16.mxu0 0
    %601 = vmatpush2.bf16.xpose.msra.mxu0 0
    %602 = vmatprep.subr.bf16.mxu0 0
    %603 = vmatpush2.bf16.xpose.msra.mxu0 0
    %604 = vmatprep.subr.bf16.mxu0 0
    %605 = vmatpush2.bf16.xpose.msra.mxu0 0
    %606 = vmatprep.subr.bf16.mxu0 0
    %607 = vmatpush2.bf16.xpose.msra.mxu0 0
    %608 = vmatprep.mubr.bf16.mxu0 0
    %609 = vmatmul.mubr.bf16.gmra.mxu0 %v344
    %v610 = vpop.f32.mrf.mxu0
    %v611 = vadd.f32 %v116, %v610
    %v612 = vpop.f32.mrf.mxu0
    %v613 = vpop.f32.mrf.mxu0
    %v614 = vadd.f32 %v117, %v613
    %v615 = vpop.f32.mrf.mxu0
    %616 = vdwg.mxu0
    %v617 = vsel %vm390, %v611, -inf
    %618 = vmax.xlane.f32.xlu0 %v617
    %v619 = vpop.xlane.xlu0 %618
    %v620 = vsel %vm390, %v614, -inf
    %621 = vmax.xlane.f32.xlu0 %v620
    %v622 = vpop.xlane.xlu0 %621
    %v623 = vsub.f32 %v611, %v619
    %v624 = vsub.f32 %v614, %v622
    %v625 = vmul.f32 %v623, 1.442695
    %v626 = vpow.pop %v625
    %v627 = vmul.f32 %v624, 1.442695
    %v628 = vpow.pop %v627
    %v629 = vsel %vm390, %v626, 0.0
    %630 = vadd.xlane.f32.xlu0 %v629
    %v631 = vpop.xlane.xlu0 %630
    %v632 = vsel %vm390, %v628, 0.0
    %633 = vadd.xlane.f32.xlu0 %v632
    %v634 = vpop.xlane.xlu0 %633
    %v635 = vrcp.pop %v631
    %v636 = vrcp.pop %v634
    %v637 = vmul.f32 %v626, %v635
    %v638 = vmul.f32 %v628, %v636
    %v639 = vpack.c.bf16 %v638, %v637
    %v640 = vmul.bf16 %v341, %v134
    %v642 = vsel %vm390, %v639, 0
    %644 = vmatprep.subr.bf16.mxu0 0
    %645 = vmatpush1.bf16.msra.mxu0 0
    %646 = vmatprep.subr.bf16.mxu0 0
    %647 = vmatpush1.bf16.msra.mxu0 0
    %648 = vmatprep.subr.bf16.mxu0 0
    %649 = vmatpush1.bf16.msra.mxu0 0
    %650 = vmatprep.subr.bf16.mxu0 0
    %651 = vmatpush1.bf16.msra.mxu0 0
    %652 = vmatprep.subr.bf16.mxu0 0
    %653 = vmatpush1.bf16.msra.mxu0 0
    %654 = vmatprep.subr.bf16.mxu0 0
    %655 = vmatpush1.bf16.msra.mxu0 0
    %656 = vmatprep.subr.bf16.mxu0 0
    %657 = vmatpush1.bf16.msra.mxu0 0
    %658 = vmatprep.subr.bf16.mxu0 0
    %659 = vmatpush1.bf16.msra.mxu0 %v640
    %660 = vmatprep.subr.bf16.mxu0 0
    %661 = vmatpush2.bf16.msra.mxu0 0
    %662 = vmatprep.subr.bf16.mxu0 0
    %663 = vmatpush2.bf16.msra.mxu0 0
    %664 = vmatprep.subr.bf16.mxu0 0
    %665 = vmatpush2.bf16.msra.mxu0 0
    %666 = vmatprep.subr.bf16.mxu0 0
    %667 = vmatpush2.bf16.msra.mxu0 0
    %668 = vmatprep.subr.bf16.mxu0 0
    %669 = vmatpush2.bf16.msra.mxu0 0
    %670 = vmatprep.subr.bf16.mxu0 0
    %671 = vmatpush2.bf16.msra.mxu0 0
    %672 = vmatprep.subr.bf16.mxu0 0
    %673 = vmatpush2.bf16.msra.mxu0 0
    %674 = vmatprep.subr.bf16.mxu0 0
    %675 = vmatpush2.bf16.msra.mxu0 0
    %676 = vmatprep.mubr.bf16.mxu0 0
    %677 = vmatmul.mubr.bf16.gmra.mxu0 %v642
    %v678 = vpop.f32.mrf.mxu0
    %v679 = vadd.f32 0.0, %v678
    %v680 = vpop.f32.mrf.mxu0
    %v681 = vpop.f32.mrf.mxu0
    %v682 = vadd.f32 0.0, %v681
    %v683 = vpop.f32.mrf.mxu0
    %684 = vdwg.mxu0
    %v685 = vadd.f32 %v566, %v679
    %v686 = vadd.f32 %v569, %v682
    %v687 = vmul.bf16 %v340, %v139
    %v689 = vsel %vm166, %v687, 0
    %691 = vmatprep.subr.bf16.mxu0 0
    %692 = vmatpush1.bf16.xpose.msra.mxu0 0
    %693 = vmatprep.subr.bf16.mxu0 0
    %694 = vmatpush1.bf16.xpose.msra.mxu0 0
    %695 = vmatprep.subr.bf16.mxu0 0
    %696 = vmatpush1.bf16.xpose.msra.mxu0 0
    %697 = vmatprep.subr.bf16.mxu0 0
    %698 = vmatpush1.bf16.xpose.msra.mxu0 0
    %699 = vmatprep.subr.bf16.mxu0 0
    %700 = vmatpush1.bf16.xpose.msra.mxu0 0
    %701 = vmatprep.subr.bf16.mxu0 0
    %702 = vmatpush1.bf16.xpose.msra.mxu0 0
    %703 = vmatprep.subr.bf16.mxu0 0
    %704 = vmatpush1.bf16.xpose.msra.mxu0 0
    %705 = vmatprep.subr.bf16.mxu0 0
    %706 = vmatpush1.bf16.xpose.msra.mxu0 %v689
    %707 = vmatprep.subr.bf16.mxu0 0
    %708 = vmatpush2.bf16.xpose.msra.mxu0 0
    %709 = vmatprep.subr.bf16.mxu0 0
    %710 = vmatpush2.bf16.xpose.msra.mxu0 0
    %711 = vmatprep.subr.bf16.mxu0 0
    %712 = vmatpush2.bf16.xpose.msra.mxu0 0
    %713 = vmatprep.subr.bf16.mxu0 0
    %714 = vmatpush2.bf16.xpose.msra.mxu0 0
    %715 = vmatprep.subr.bf16.mxu0 0
    %716 = vmatpush2.bf16.xpose.msra.mxu0 0
    %717 = vmatprep.subr.bf16.mxu0 0
    %718 = vmatpush2.bf16.xpose.msra.mxu0 0
    %719 = vmatprep.subr.bf16.mxu0 0
    %720 = vmatpush2.bf16.xpose.msra.mxu0 0
    %721 = vmatprep.subr.bf16.mxu0 0
    %722 = vmatpush2.bf16.xpose.msra.mxu0 0
    %723 = vmatprep.mubr.bf16.mxu0 0
    %724 = vmatmul.mubr.bf16.gmra.mxu0 %v344
    %v725 = vpop.f32.mrf.mxu0
    %v726 = vadd.f32 %v116, %v725
    %v727 = vpop.f32.mrf.mxu0
    %v728 = vpop.f32.mrf.mxu0
    %v729 = vadd.f32 %v117, %v728
    %v730 = vpop.f32.mrf.mxu0
    %731 = vdwg.mxu0
    %v732 = vsel %vm390, %v726, -inf
    %733 = vmax.xlane.f32.xlu0 %v732
    %v734 = vpop.xlane.xlu0 %733
    %v735 = vsel %vm390, %v729, -inf
    %736 = vmax.xlane.f32.xlu0 %v735
    %v737 = vpop.xlane.xlu0 %736
    %v738 = vsub.f32 %v726, %v734
    %v739 = vsub.f32 %v729, %v737
    %v740 = vmul.f32 %v738, 1.442695
    %v741 = vpow.pop %v740
    %v742 = vmul.f32 %v739, 1.442695
    %v743 = vpow.pop %v742
    %v744 = vsel %vm390, %v741, 0.0
    %745 = vadd.xlane.f32.xlu0 %v744
    %v746 = vpop.xlane.xlu0 %745
    %v747 = vsel %vm390, %v743, 0.0
    %748 = vadd.xlane.f32.xlu0 %v747
    %v749 = vpop.xlane.xlu0 %748
    %v750 = vrcp.pop %v746
    %v751 = vrcp.pop %v749
    %v752 = vmul.f32 %v741, %v750
    %v753 = vmul.f32 %v743, %v751
    %v754 = vpack.c.bf16 %v753, %v752
    %v755 = vmul.bf16 %v341, %v139
    %v757 = vsel %vm390, %v754, 0
    %759 = vmatprep.subr.bf16.mxu0 0
    %760 = vmatpush1.bf16.msra.mxu0 0
    %761 = vmatprep.subr.bf16.mxu0 0
    %762 = vmatpush1.bf16.msra.mxu0 0
    %763 = vmatprep.subr.bf16.mxu0 0
    %764 = vmatpush1.bf16.msra.mxu0 0
    %765 = vmatprep.subr.bf16.mxu0 0
    %766 = vmatpush1.bf16.msra.mxu0 0
    %767 = vmatprep.subr.bf16.mxu0 0
    %768 = vmatpush1.bf16.msra.mxu0 0
    %769 = vmatprep.subr.bf16.mxu0 0
    %770 = vmatpush1.bf16.msra.mxu0 0
    %771 = vmatprep.subr.bf16.mxu0 0
    %772 = vmatpush1.bf16.msra.mxu0 0
    %773 = vmatprep.subr.bf16.mxu0 0
    %774 = vmatpush1.bf16.msra.mxu0 %v755
    %775 = vmatprep.subr.bf16.mxu0 0
    %776 = vmatpush2.bf16.msra.mxu0 0
    %777 = vmatprep.subr.bf16.mxu0 0
    %778 = vmatpush2.bf16.msra.mxu0 0
    %779 = vmatprep.subr.bf16.mxu0 0
    %780 = vmatpush2.bf16.msra.mxu0 0
    %781 = vmatprep.subr.bf16.mxu0 0
    %782 = vmatpush2.bf16.msra.mxu0 0
    %783 = vmatprep.subr.bf16.mxu0 0
    %784 = vmatpush2.bf16.msra.mxu0 0
    %785 = vmatprep.subr.bf16.mxu0 0
    %786 = vmatpush2.bf16.msra.mxu0 0
    %787 = vmatprep.subr.bf16.mxu0 0
    %788 = vmatpush2.bf16.msra.mxu0 0
    %789 = vmatprep.subr.bf16.mxu0 0
    %790 = vmatpush2.bf16.msra.mxu0 0
    %791 = vmatprep.mubr.bf16.mxu0 0
    %792 = vmatmul.mubr.bf16.gmra.mxu0 %v757
    %v793 = vpop.f32.mrf.mxu0
    %v794 = vadd.f32 0.0, %v793
    %v795 = vpop.f32.mrf.mxu0
    %v796 = vpop.f32.mrf.mxu0
    %v797 = vadd.f32 0.0, %v796
    %v798 = vpop.f32.mrf.mxu0
    %799 = vdwg.mxu0
    %v800 = vadd.f32 %v685, %v794
    %v801 = vadd.f32 %v686, %v797
    %v802 = vpack.c.bf16 %v801, %v800
    %v803 = vld [vmem:[#allocation7] sm:$0xf]
    %v804 = vld [vmem:[#allocation7 + $0x4] sm:$0xf]
    %v805 = vld [vmem:[#allocation7 + $0x8] sm:$0xf]
    %v806 = vld [vmem:[#allocation7 + $0xc] sm:$0xf]
    %v807 = vld [vmem:[%s9] sm:$0x1]
    %v809 = vlaneseq
    %v810 = vshrl.u32 %v809, 7
    %v811 = vsub.s32 0, %v810
    %v812 = vrot.slane %v807, %v811
    %v818 = vunpack.c.l.b16 %v803
    %v819 = vunpack.c.l.b16 %v804
    %v820 = vunpack.c.l.b16 %v805
    %v821 = vunpack.c.l.b16 %v806
    %v822 = vpack.c.b16 %v819, %v818
    %v823 = vpack.c.b16 %v821, %v820
    %v827 = vsel %vm166, %v802, 0
    %829 = vmatprep.subr.bf16.mxu0 0
    %830 = vmatpush1.bf16.msra.mxu0 0
    %831 = vmatprep.subr.bf16.mxu0 0
    %832 = vmatpush1.bf16.msra.mxu0 0
    %833 = vmatprep.subr.bf16.mxu0 0
    %834 = vmatpush1.bf16.msra.mxu0 0
    %835 = vmatprep.subr.bf16.mxu0 0
    %836 = vmatpush1.bf16.msra.mxu0 0
    %837 = vmatprep.subr.bf16.mxu0 0
    %838 = vmatpush1.bf16.msra.mxu0 0
    %839 = vmatprep.subr.bf16.mxu0 0
    %840 = vmatpush1.bf16.msra.mxu0 0
    %841 = vmatprep.subr.bf16.mxu0 0
    %842 = vmatpush1.bf16.msra.mxu0 %v823
    %843 = vmatprep.subr.bf16.mxu0 0
    %844 = vmatpush1.bf16.msra.mxu0 %v822
    %845 = vmatprep.subr.bf16.mxu0 0
    %846 = vmatpush2.bf16.msra.mxu0 0
    %847 = vmatprep.subr.bf16.mxu0 0
    %848 = vmatpush2.bf16.msra.mxu0 0
    %849 = vmatprep.subr.bf16.mxu0 0
    %850 = vmatpush2.bf16.msra.mxu0 0
    %851 = vmatprep.subr.bf16.mxu0 0
    %852 = vmatpush2.bf16.msra.mxu0 0
    %853 = vmatprep.subr.bf16.mxu0 0
    %854 = vmatpush2.bf16.msra.mxu0 0
    %855 = vmatprep.subr.bf16.mxu0 0
    %856 = vmatpush2.bf16.msra.mxu0 0
    %857 = vmatprep.subr.bf16.mxu0 0
    %858 = vmatpush2.bf16.msra.mxu0 0
    %859 = vmatprep.subr.bf16.mxu0 0
    %860 = vmatpush2.bf16.msra.mxu0 0
    %861 = vmatprep.mubr.bf16.mxu0 0
    %862 = vmatmul.mubr.bf16.gmra.mxu0 %v827
    %v863 = vpop.f32.mrf.mxu0
    %v864 = vadd.f32 %v812, %v863
    %v865 = vpop.f32.mrf.mxu0
    %v866 = vpop.f32.mrf.mxu0
    %v867 = vadd.f32 %v812, %v866
    %v868 = vpop.f32.mrf.mxu0
    %869 = vdwg.mxu0
    %v870 = vadd.f32 %v140, %v864
    %v871 = vadd.f32 %v141, %v867
    %v872 = vld [vmem:[%s10] sm:$0x1]
    %v873 = vld [vmem:[%s11] sm:$0x1]
    %v874 = vsel %vm166, %v870, 0.0
    %875 = vadd.xlane.f32.xlu0 %v874
    %v876 = vpop.xlane.xlu0 %875
    %v877 = vsel %vm166, %v871, 0.0
    %878 = vadd.xlane.f32.xlu0 %v877
    %v879 = vpop.xlane.xlu0 %878
    %v880 = vrcp.pop 32.0
    %v881 = vmul.f32 %v876, %v880
    %v882 = vmul.f32 %v879, %v880
    %v883 = vsub.f32 %v870, %v881
    %v884 = vsub.f32 %v871, %v882
    %v885 = vmul.f32 %v883, %v883
    %v886 = vmul.f32 %v884, %v884
    %v887 = vsel %vm166, %v885, 0.0
    %888 = vadd.xlane.f32.xlu0 %v887
    %v889 = vpop.xlane.xlu0 %888
    %v890 = vsel %vm166, %v886, 0.0
    %891 = vadd.xlane.f32.xlu0 %v890
    %v892 = vpop.xlane.xlu0 %891
    %v893 = vmul.f32 %v889, %v880
    %v894 = vmul.f32 %v892, %v880
    %v895 = vadd.f32 %v893, 1e-12
    %v896 = vadd.f32 %v894, 1e-12
    %v897 = vrsqrt.pop %v895
    %v898 = vrsqrt.pop %v896
    %v899 = vmul.f32 %v883, %v897
    %v900 = vmul.f32 %v884, %v898
    %v902 = vlaneseq
    %v903 = vshrl.u32 %v902, 7
    %v904 = vsub.s32 0, %v903
    %v905 = vrot.slane %v872, %v904
    %v907 = vmul.f32 %v899, %v905
    %v908 = vmul.f32 %v900, %v905
    %v910 = vlaneseq
    %v911 = vshrl.u32 %v910, 7
    %v912 = vsub.s32 0, %v911
    %v913 = vrot.slane %v873, %v912
    %v915 = vadd.f32 %v907, %v913
    %v916 = vadd.f32 %v908, %v913
    %v917 = vpack.c.bf16 %v916, %v915
    %v918 = vld [vmem:[#allocation8] sm:$0xf]
    %v919 = vld [vmem:[#allocation8 + $0x4] sm:$0xf]
    %v920 = vld [vmem:[#allocation8 + $0x8] sm:$0xf]
    %v921 = vld [vmem:[#allocation8 + $0xc] sm:$0xf]
    %v922 = vld [vmem:[%s13] sm:$0x1]
    %v924 = vlaneseq
    %v925 = vshrl.u32 %v924, 7
    %v926 = vsub.s32 0, %v925
    %v927 = vrot.slane %v922, %v926
    %v933 = vunpack.c.l.b16 %v918
    %v934 = vunpack.c.l.b16 %v919
    %v935 = vunpack.c.l.b16 %v920
    %v936 = vunpack.c.l.b16 %v921
    %v937 = vpack.c.b16 %v934, %v933
    %v938 = vpack.c.b16 %v936, %v935
    %v942 = vsel %vm166, %v917, 0
    %944 = vmatprep.subr.bf16.mxu0 0
    %945 = vmatpush1.bf16.msra.mxu0 0
    %946 = vmatprep.subr.bf16.mxu0 0
    %947 = vmatpush1.bf16.msra.mxu0 0
    %948 = vmatprep.subr.bf16.mxu0 0
    %949 = vmatpush1.bf16.msra.mxu0 0
    %950 = vmatprep.subr.bf16.mxu0 0
    %951 = vmatpush1.bf16.msra.mxu0 0
    %952 = vmatprep.subr.bf16.mxu0 0
    %953 = vmatpush1.bf16.msra.mxu0 0
    %954 = vmatprep.subr.bf16.mxu0 0
    %955 = vmatpush1.bf16.msra.mxu0 0
    %956 = vmatprep.subr.bf16.mxu0 0
    %957 = vmatpush1.bf16.msra.mxu0 %v938
    %958 = vmatprep.subr.bf16.mxu0 0
    %959 = vmatpush1.bf16.msra.mxu0 %v937
    %960 = vmatprep.subr.bf16.mxu0 0
    %961 = vmatpush2.bf16.msra.mxu0 0
    %962 = vmatprep.subr.bf16.mxu0 0
    %963 = vmatpush2.bf16.msra.mxu0 0
    %964 = vmatprep.subr.bf16.mxu0 0
    %965 = vmatpush2.bf16.msra.mxu0 0
    %966 = vmatprep.subr.bf16.mxu0 0
    %967 = vmatpush2.bf16.msra.mxu0 0
    %968 = vmatprep.subr.bf16.mxu0 0
    %969 = vmatpush2.bf16.msra.mxu0 0
    %970 = vmatprep.subr.bf16.mxu0 0
    %971 = vmatpush2.bf16.msra.mxu0 0
    %972 = vmatprep.subr.bf16.mxu0 0
    %973 = vmatpush2.bf16.msra.mxu0 0
    %974 = vmatprep.subr.bf16.mxu0 0
    %975 = vmatpush2.bf16.msra.mxu0 0
    %976 = vmatprep.mubr.bf16.mxu0 0
    %977 = vmatmul.mubr.bf16.gmra.mxu0 %v942
    %v978 = vpop.f32.mrf.mxu0
    %v979 = vadd.f32 %v927, %v978
    %v980 = vpop.f32.mrf.mxu0
    %v981 = vpop.f32.mrf.mxu0
    %v982 = vadd.f32 %v927, %v981
    %v983 = vpop.f32.mrf.mxu0
    %984 = vdwg.mxu0
    %v985 = vmul.f32 %v979, 0.5
    %v986 = vmul.f32 %v982, 0.5
    %v987 = vmul.f32 %v979, 0.70710677
    %v988 = vmul.f32 %v982, 0.70710677
    %v989 = verf.f32.pop %v987
    %v990 = verf.f32.pop %v988
    %v991 = vadd.f32 %v989, 1.0
    %v992 = vadd.f32 %v990, 1.0
    %v993 = vmul.f32 %v985, %v991
    %v994 = vmul.f32 %v986, %v992
    %v995 = vpack.c.bf16 %v994, %v993
    %v996 = vld [vmem:[%s14] sm:$0xf]
    %v997 = vld [vmem:[%s14 + $0x4] sm:$0xf]
    %v998 = vld [vmem:[%s14 + $0x8] sm:$0xf]
    %v999 = vld [vmem:[%s14 + $0xc] sm:$0xf]
    %v1000 = vld [vmem:[%s14 + $0x10] sm:$0xf]
    %v1001 = vld [vmem:[%s14 + $0x14] sm:$0xf]
    %v1002 = vld [vmem:[%s14 + $0x18] sm:$0xf]
    %v1003 = vld [vmem:[%s14 + $0x1c] sm:$0xf]
    %v1004 = vld [vmem:[%s15] sm:$0x1]
    %v1006 = vlaneseq
    %v1007 = vshrl.u32 %v1006, 7
    %v1008 = vsub.s32 0, %v1007
    %v1009 = vrot.slane %v1004, %v1008
    %v1019 = vunpack.c.l.b16 %v996
    %v1020 = vunpack.c.l.b16 %v997
    %v1021 = vunpack.c.l.b16 %v998
    %v1022 = vunpack.c.l.b16 %v999
    %v1023 = vunpack.c.l.b16 %v1000
    %v1024 = vunpack.c.l.b16 %v1001
    %v1025 = vunpack.c.l.b16 %v1002
    %v1026 = vunpack.c.l.b16 %v1003
    %v1027 = vpack.c.b16 %v1020, %v1019
    %v1028 = vpack.c.b16 %v1022, %v1021
    %v1029 = vpack.c.b16 %v1024, %v1023
    %v1030 = vpack.c.b16 %v1026, %v1025
    %vm1035 = vcmask 523264
    %v1037 = vsel %vm1035, %v995, 0
    %1039 = vmatprep.subr.bf16.mxu0 0
    %1040 = vmatpush1.bf16.msra.mxu0 0
    %1041 = vmatprep.subr.bf16.mxu0 0
    %1042 = vmatpush1.bf16.msra.mxu0 0
    %1043 = vmatprep.subr.bf16.mxu0 0
    %1044 = vmatpush1.bf16.msra.mxu0 0
    %1045 = vmatprep.subr.bf16.mxu0 0
    %1046 = vmatpush1.bf16.msra.mxu0 0
    %1047 = vmatprep.subr.bf16.mxu0 0
    %1048 = vmatpush1.bf16.msra.mxu0 %v1030
    %1049 = vmatprep.subr.bf16.mxu0 0
    %1050 = vmatpush1.bf16.msra.mxu0 %v1029
    %1051 = vmatprep.subr.bf16.mxu0 0
    %1052 = vmatpush1.bf16.msra.mxu0 %v1028
    %1053 = vmatprep.subr.bf16.mxu0 0
    %1054 = vmatpush1.bf16.msra.mxu0 %v1027
    %1055 = vmatprep.subr.bf16.mxu0 0
    %1056 = vmatpush2.bf16.msra.mxu0 0
    %1057 = vmatprep.subr.bf16.mxu0 0
    %1058 = vmatpush2.bf16.msra.mxu0 0
    %1059 = vmatprep.subr.bf16.mxu0 0
    %1060 = vmatpush2.bf16.msra.mxu0 0
    %1061 = vmatprep.subr.bf16.mxu0 0
    %1062 = vmatpush2.bf16.msra.mxu0 0
    %1063 = vmatprep.subr.bf16.mxu0 0
    %1064 = vmatpush2.bf16.msra.mxu0 0
    %1065 = vmatprep.subr.bf16.mxu0 0
    %1066 = vmatpush2.bf16.msra.mxu0 0
    %1067 = vmatprep.subr.bf16.mxu0 0
    %1068 = vmatpush2.bf16.msra.mxu0 0
    %1069 = vmatprep.subr.bf16.mxu0 0
    %1070 = vmatpush2.bf16.msra.mxu0 0
    %1071 = vmatprep.mubr.bf16.mxu0 0
    %1072 = vmatmul.mubr.bf16.gmra.mxu0 %v1037
    %v1073 = vpop.f32.mrf.mxu0
    %v1074 = vadd.f32 %v1009, %v1073
    %v1075 = vpop.f32.mrf.mxu0
    %v1076 = vpop.f32.mrf.mxu0
    %v1077 = vadd.f32 %v1009, %v1076
    %v1078 = vpop.f32.mrf.mxu0
    %1079 = vdwg.mxu0
    %v1080 = vadd.f32 %v915, %v1074
    %v1081 = vadd.f32 %v916, %v1077
    %v1082 = vld [vmem:[%s16] sm:$0x1]
    %v1083 = vld [vmem:[%s17] sm:$0x1]
    %v1084 = vsel %vm166, %v1080, 0.0
    %1085 = vadd.xlane.f32.xlu0 %v1084
    %v1086 = vpop.xlane.xlu0 %1085
    %v1087 = vsel %vm166, %v1081, 0.0
    %1088 = vadd.xlane.f32.xlu0 %v1087
    %v1089 = vpop.xlane.xlu0 %1088
    %v1090 = vmul.f32 %v1086, %v880
    %v1091 = vmul.f32 %v1089, %v880
    %v1092 = vsub.f32 %v1080, %v1090
    %v1093 = vsub.f32 %v1081, %v1091
    %v1094 = vmul.f32 %v1092, %v1092
    %v1095 = vmul.f32 %v1093, %v1093
    %v1096 = vsel %vm166, %v1094, 0.0
    %1097 = vadd.xlane.f32.xlu0 %v1096
    %v1098 = vpop.xlane.xlu0 %1097
    %v1099 = vsel %vm166, %v1095, 0.0
    %1100 = vadd.xlane.f32.xlu0 %v1099
    %v1101 = vpop.xlane.xlu0 %1100
    %v1102 = vmul.f32 %v1098, %v880
    %v1103 = vmul.f32 %v1101, %v880
    %v1104 = vadd.f32 %v1102, 1e-12
    %v1105 = vadd.f32 %v1103, 1e-12
    %v1106 = vrsqrt.pop %v1104
    %v1107 = vrsqrt.pop %v1105
    %v1108 = vmul.f32 %v1092, %v1106
    %v1109 = vmul.f32 %v1093, %v1107
    %v1111 = vlaneseq
    %v1112 = vshrl.u32 %v1111, 7
    %v1113 = vsub.s32 0, %v1112
    %v1114 = vrot.slane %v1082, %v1113
    %v1116 = vmul.f32 %v1108, %v1114
    %v1117 = vmul.f32 %v1109, %v1114
    %v1119 = vlaneseq
    %v1120 = vshrl.u32 %v1119, 7
    %v1121 = vsub.s32 0, %v1120
    %v1122 = vrot.slane %v1083, %v1121
    %v1124 = vadd.f32 %v1116, %v1122
    %v1125 = vadd.f32 %v1117, %v1122
    %s1126 = scalar_lea.vmem %s0, 16
    %v1127 = vld [vmem:[%s1126] sm:$0xff]
    %v1128 = vld [vmem:[%s1126 + $0x8] sm:$0xff]
    %v1129 = vpack.c.bf16 %v1128, %v1127
    %s1130 = scalar_lea.vmem %s2, 16
    %v1131 = vld [vmem:[%s1130] sm:$0xf]
    %v1132 = vld [vmem:[%s1130 + $0x4] sm:$0xf]
    %v1133 = vld [vmem:[%s1130 + $0x8] sm:$0xf]
    %v1134 = vld [vmem:[%s1130 + $0xc] sm:$0xf]
    %s1135 = scalar_lea.vmem %s3, 1
    %v1136 = vld [vmem:[%s1135] sm:$0x1]
    %v1138 = vlaneseq
    %v1139 = vshrl.u32 %v1138, 7
    %v1140 = vsub.s32 0, %v1139
    %v1141 = vrot.slane %v1136, %v1140
    %v1147 = vunpack.c.l.b16 %v1131
    %v1148 = vunpack.c.l.b16 %v1132
    %v1149 = vunpack.c.l.b16 %v1133
    %v1150 = vunpack.c.l.b16 %v1134
    %v1151 = vpack.c.b16 %v1148, %v1147
    %v1152 = vpack.c.b16 %v1150, %v1149
    %v1156 = vsel %vm166, %v1129, 0
    %1158 = vmatprep.subr.bf16.mxu0 0
    %1159 = vmatpush1.bf16.msra.mxu0 0
    %1160 = vmatprep.subr.bf16.mxu0 0
    %1161 = vmatpush1.bf16.msra.mxu0 0
    %1162 = vmatprep.subr.bf16.mxu0 0
    %1163 = vmatpush1.bf16.msra.mxu0 0
    %1164 = vmatprep.subr.bf16.mxu0 0
    %1165 = vmatpush1.bf16.msra.mxu0 0
    %1166 = vmatprep.subr.bf16.mxu0 0
    %1167 = vmatpush1.bf16.msra.mxu0 0
    %1168 = vmatprep.subr.bf16.mxu0 0
    %1169 = vmatpush1.bf16.msra.mxu0 0
    %1170 = vmatprep.subr.bf16.mxu0 0
    %1171 = vmatpush1.bf16.msra.mxu0 %v1152
    %1172 = vmatprep.subr.bf16.mxu0 0
    %1173 = vmatpush1.bf16.msra.mxu0 %v1151
    %1174 = vmatprep.subr.bf16.mxu0 0
    %1175 = vmatpush2.bf16.msra.mxu0 0
    %1176 = vmatprep.subr.bf16.mxu0 0
    %1177 = vmatpush2.bf16.msra.mxu0 0
    %1178 = vmatprep.subr.bf16.mxu0 0
    %1179 = vmatpush2.bf16.msra.mxu0 0
    %1180 = vmatprep.subr.bf16.mxu0 0
    %1181 = vmatpush2.bf16.msra.mxu0 0
    %1182 = vmatprep.subr.bf16.mxu0 0
    %1183 = vmatpush2.bf16.msra.mxu0 0
    %1184 = vmatprep.subr.bf16.mxu0 0
    %1185 = vmatpush2.bf16.msra.mxu0 0
    %1186 = vmatprep.subr.bf16.mxu0 0
    %1187 = vmatpush2.bf16.msra.mxu0 0
    %1188 = vmatprep.subr.bf16.mxu0 0
    %1189 = vmatpush2.bf16.msra.mxu0 0
    %1190 = vmatprep.mubr.bf16.mxu0 0
    %1191 = vmatmul.mubr.bf16.gmra.mxu0 %v1156
    %v1192 = vpop.f32.mrf.mxu0
    %v1193 = vadd.f32 %v1141, %v1192
    %v1194 = vpop.f32.mrf.mxu0
    %v1195 = vpop.f32.mrf.mxu0
    %v1196 = vadd.f32 %v1141, %v1195
    %v1197 = vpop.f32.mrf.mxu0
    %1198 = vdwg.mxu0
    %s1199 = scalar_lea.vmem %s4, 16
    %v1200 = vld [vmem:[%s1199] sm:$0xf]
    %v1201 = vld [vmem:[%s1199 + $0x4] sm:$0xf]
    %v1202 = vld [vmem:[%s1199 + $0x8] sm:$0xf]
    %v1203 = vld [vmem:[%s1199 + $0xc] sm:$0xf]
    %s1204 = scalar_lea.vmem %s5, 1
    %v1205 = vld [vmem:[%s1204] sm:$0x1]
    %v1207 = vlaneseq
    %v1208 = vshrl.u32 %v1207, 7
    %v1209 = vsub.s32 0, %v1208
    %v1210 = vrot.slane %v1205, %v1209
    %v1216 = vunpack.c.l.b16 %v1200
    %v1217 = vunpack.c.l.b16 %v1201
    %v1218 = vunpack.c.l.b16 %v1202
    %v1219 = vunpack.c.l.b16 %v1203
    %v1220 = vpack.c.b16 %v1217, %v1216
    %v1221 = vpack.c.b16 %v1219, %v1218
    %1224 = vmatprep.subr.bf16.mxu0 0
    %1225 = vmatpush1.bf16.msra.mxu0 0
    %1226 = vmatprep.subr.bf16.mxu0 0
    %1227 = vmatpush1.bf16.msra.mxu0 0
    %1228 = vmatprep.subr.bf16.mxu0 0
    %1229 = vmatpush1.bf16.msra.mxu0 0
    %1230 = vmatprep.subr.bf16.mxu0 0
    %1231 = vmatpush1.bf16.msra.mxu0 0
    %1232 = vmatprep.subr.bf16.mxu0 0
    %1233 = vmatpush1.bf16.msra.mxu0 0
    %1234 = vmatprep.subr.bf16.mxu0 0
    %1235 = vmatpush1.bf16.msra.mxu0 0
    %1236 = vmatprep.subr.bf16.mxu0 0
    %1237 = vmatpush1.bf16.msra.mxu0 %v1221
    %1238 = vmatprep.subr.bf16.mxu0 0
    %1239 = vmatpush1.bf16.msra.mxu0 %v1220
    %1240 = vmatprep.subr.bf16.mxu0 0
    %1241 = vmatpush2.bf16.msra.mxu0 0
    %1242 = vmatprep.subr.bf16.mxu0 0
    %1243 = vmatpush2.bf16.msra.mxu0 0
    %1244 = vmatprep.subr.bf16.mxu0 0
    %1245 = vmatpush2.bf16.msra.mxu0 0
    %1246 = vmatprep.subr.bf16.mxu0 0
    %1247 = vmatpush2.bf16.msra.mxu0 0
    %1248 = vmatprep.subr.bf16.mxu0 0
    %1249 = vmatpush2.bf16.msra.mxu0 0
    %1250 = vmatprep.subr.bf16.mxu0 0
    %1251 = vmatpush2.bf16.msra.mxu0 0
    %1252 = vmatprep.subr.bf16.mxu0 0
    %1253 = vmatpush2.bf16.msra.mxu0 0
    %1254 = vmatprep.subr.bf16.mxu0 0
    %1255 = vmatpush2.bf16.msra.mxu0 0
    %1256 = vmatprep.mubr.bf16.mxu0 0
    %1257 = vmatmul.mubr.bf16.gmra.mxu0 %v1156
    %v1258 = vpop.f32.mrf.mxu0
    %v1259 = vadd.f32 %v1210, %v1258
    %v1260 = vpop.f32.mrf.mxu0
    %v1261 = vpop.f32.mrf.mxu0
    %v1262 = vadd.f32 %v1210, %v1261
    %v1263 = vpop.f32.mrf.mxu0
    %1264 = vdwg.mxu0
    %s1265 = scalar_lea.vmem [#allocation5], 16
    %v1266 = vld [vmem:[%s1265] sm:$0xf]
    %v1267 = vld [vmem:[%s1265 + $0x4] sm:$0xf]
    %v1268 = vld [vmem:[%s1265 + $0x8] sm:$0xf]
    %v1269 = vld [vmem:[%s1265 + $0xc] sm:$0xf]
    %s1270 = scalar_lea.vmem %s7, 1
    %v1271 = vld [vmem:[%s1270] sm:$0x1]
    %v1273 = vlaneseq
    %v1274 = vshrl.u32 %v1273, 7
    %v1275 = vsub.s32 0, %v1274
    %v1276 = vrot.slane %v1271, %v1275
    %v1282 = vunpack.c.l.b16 %v1266
    %v1283 = vunpack.c.l.b16 %v1267
    %v1284 = vunpack.c.l.b16 %v1268
    %v1285 = vunpack.c.l.b16 %v1269
    %v1286 = vpack.c.b16 %v1283, %v1282
    %v1287 = vpack.c.b16 %v1285, %v1284
    %1290 = vmatprep.subr.bf16.mxu0 0
    %1291 = vmatpush1.bf16.msra.mxu0 0
    %1292 = vmatprep.subr.bf16.mxu0 0
    %1293 = vmatpush1.bf16.msra.mxu0 0
    %1294 = vmatprep.subr.bf16.mxu0 0
    %1295 = vmatpush1.bf16.msra.mxu0 0
    %1296 = vmatprep.subr.bf16.mxu0 0
    %1297 = vmatpush1.bf16.msra.mxu0 0
    %1298 = vmatprep.subr.bf16.mxu0 0
    %1299 = vmatpush1.bf16.msra.mxu0 0
    %1300 = vmatprep.subr.bf16.mxu0 0
    %1301 = vmatpush1.bf16.msra.mxu0 0
    %1302 = vmatprep.subr.bf16.mxu0 0
    %1303 = vmatpush1.bf16.msra.mxu0 %v1287
    %1304 = vmatprep.subr.bf16.mxu0 0
    %1305 = vmatpush1.bf16.msra.mxu0 %v1286
    %1306 = vmatprep.subr.bf16.mxu0 0
    %1307 = vmatpush2.bf16.msra.mxu0 0
    %1308 = vmatprep.subr.bf16.mxu0 0
    %1309 = vmatpush2.bf16.msra.mxu0 0
    %1310 = vmatprep.subr.bf16.mxu0 0
    %1311 = vmatpush2.bf16.msra.mxu0 0
    %1312 = vmatprep.subr.bf16.mxu0 0
    %1313 = vmatpush2.bf16.msra.mxu0 0
    %1314 = vmatprep.subr.bf16.mxu0 0
    %1315 = vmatpush2.bf16.msra.mxu0 0
    %1316 = vmatprep.subr.bf16.mxu0 0
    %1317 = vmatpush2.bf16.msra.mxu0 0
    %1318 = vmatprep.subr.bf16.mxu0 0
    %1319 = vmatpush2.bf16.msra.mxu0 0
    %1320 = vmatprep.subr.bf16.mxu0 0
    %1321 = vmatpush2.bf16.msra.mxu0 0
    %1322 = vmatprep.mubr.bf16.mxu0 0
    %1323 = vmatmul.mubr.bf16.gmra.mxu0 %v1156
    %v1324 = vpop.f32.mrf.mxu0
    %v1325 = vadd.f32 %v1276, %v1324
    %v1326 = vpop.f32.mrf.mxu0
    %v1327 = vpop.f32.mrf.mxu0
    %v1328 = vadd.f32 %v1276, %v1327
    %v1329 = vpop.f32.mrf.mxu0
    %1330 = vdwg.mxu0
    %v1331 = vpack.c.bf16 %v1196, %v1193
    %v1332 = vpack.c.bf16 %v1262, %v1259
    %v1333 = vpack.c.bf16 %v1328, %v1325
    %v1334 = vmul.bf16 %v1332, %v124
    %v1336 = vsel %vm166, %v1331, 0
    %v1339 = vsel %vm166, %v1334, 0
    %1341 = vmatprep.subr.bf16.mxu0 0
    %1342 = vmatpush1.bf16.xpose.msra.mxu0 0
    %1343 = vmatprep.subr.bf16.mxu0 0
    %1344 = vmatpush1.bf16.xpose.msra.mxu0 0
    %1345 = vmatprep.subr.bf16.mxu0 0
    %1346 = vmatpush1.bf16.xpose.msra.mxu0 0
    %1347 = vmatprep.subr.bf16.mxu0 0
    %1348 = vmatpush1.bf16.xpose.msra.mxu0 0
    %1349 = vmatprep.subr.bf16.mxu0 0
    %1350 = vmatpush1.bf16.xpose.msra.mxu0 0
    %1351 = vmatprep.subr.bf16.mxu0 0
    %1352 = vmatpush1.bf16.xpose.msra.mxu0 0
    %1353 = vmatprep.subr.bf16.mxu0 0
    %1354 = vmatpush1.bf16.xpose.msra.mxu0 0
    %1355 = vmatprep.subr.bf16.mxu0 0
    %1356 = vmatpush1.bf16.xpose.msra.mxu0 %v1339
    %1357 = vmatprep.subr.bf16.mxu0 0
    %1358 = vmatpush2.bf16.xpose.msra.mxu0 0
    %1359 = vmatprep.subr.bf16.mxu0 0
    %1360 = vmatpush2.bf16.xpose.msra.mxu0 0
    %1361 = vmatprep.subr.bf16.mxu0 0
    %1362 = vmatpush2.bf16.xpose.msra.mxu0 0
    %1363 = vmatprep.subr.bf16.mxu0 0
    %1364 = vmatpush2.bf16.xpose.msra.mxu0 0
    %1365 = vmatprep.subr.bf16.mxu0 0
    %1366 = vmatpush2.bf16.xpose.msra.mxu0 0
    %1367 = vmatprep.subr.bf16.mxu0 0
    %1368 = vmatpush2.bf16.xpose.msra.mxu0 0
    %1369 = vmatprep.subr.bf16.mxu0 0
    %1370 = vmatpush2.bf16.xpose.msra.mxu0 0
    %1371 = vmatprep.subr.bf16.mxu0 0
    %1372 = vmatpush2.bf16.xpose.msra.mxu0 0
    %1373 = vmatprep.mubr.bf16.mxu0 0
    %1374 = vmatmul.mubr.bf16.gmra.mxu0 %v1336
    %v1375 = vpop.f32.mrf.mxu0
    %v1376 = vadd.f32 %v116, %v1375
    %v1377 = vpop.f32.mrf.mxu0
    %v1378 = vpop.f32.mrf.mxu0
    %v1379 = vadd.f32 %v117, %v1378
    %v1380 = vpop.f32.mrf.mxu0
    %1381 = vdwg.mxu0
    %v1382 = vsel %vm390, %v1376, -inf
    %1383 = vmax.xlane.f32.xlu0 %v1382
    %v1384 = vpop.xlane.xlu0 %1383
    %v1385 = vsel %vm390, %v1379, -inf
    %1386 = vmax.xlane.f32.xlu0 %v1385
    %v1387 = vpop.xlane.xlu0 %1386
    %v1388 = vsub.f32 %v1376, %v1384
    %v1389 = vsub.f32 %v1379, %v1387
    %v1390 = vmul.f32 %v1388, 1.442695
    %v1391 = vpow.pop %v1390
    %v1392 = vmul.f32 %v1389, 1.442695
    %v1393 = vpow.pop %v1392
    %v1394 = vsel %vm390, %v1391, 0.0
    %1395 = vadd.xlane.f32.xlu0 %v1394
    %v1396 = vpop.xlane.xlu0 %1395
    %v1397 = vsel %vm390, %v1393, 0.0
    %1398 = vadd.xlane.f32.xlu0 %v1397
    %v1399 = vpop.xlane.xlu0 %1398
    %v1400 = vrcp.pop %v1396
    %v1401 = vrcp.pop %v1399
    %v1402 = vmul.f32 %v1391, %v1400
    %v1403 = vmul.f32 %v1393, %v1401
    %v1404 = vpack.c.bf16 %v1403, %v1402
    %v1405 = vmul.bf16 %v1333, %v124
    %v1406 = vmul.bf16 %v1332, %v129
    %v1408 = vsel %vm166, %v1406, 0
    %1410 = vmatprep.subr.bf16.mxu0 0
    %1411 = vmatpush1.bf16.xpose.msra.mxu0 0
    %1412 = vmatprep.subr.bf16.mxu0 0
    %1413 = vmatpush1.bf16.xpose.msra.mxu0 0
    %1414 = vmatprep.subr.bf16.mxu0 0
    %1415 = vmatpush1.bf16.xpose.msra.mxu0 0
    %1416 = vmatprep.subr.bf16.mxu0 0
    %1417 = vmatpush1.bf16.xpose.msra.mxu0 0
    %1418 = vmatprep.subr.bf16.mxu0 0
    %1419 = vmatpush1.bf16.xpose.msra.mxu0 0
    %1420 = vmatprep.subr.bf16.mxu0 0
    %1421 = vmatpush1.bf16.xpose.msra.mxu0 0
    %1422 = vmatprep.subr.bf16.mxu0 0
    %1423 = vmatpush1.bf16.xpose.msra.mxu0 0
    %1424 = vmatprep.subr.bf16.mxu0 0
    %1425 = vmatpush1.bf16.xpose.msra.mxu0 %v1408
    %1426 = vmatprep.subr.bf16.mxu0 0
    %1427 = vmatpush2.bf16.xpose.msra.mxu0 0
    %1428 = vmatprep.subr.bf16.mxu0 0
    %1429 = vmatpush2.bf16.xpose.msra.mxu0 0
    %1430 = vmatprep.subr.bf16.mxu0 0
    %1431 = vmatpush2.bf16.xpose.msra.mxu0 0
    %1432 = vmatprep.subr.bf16.mxu0 0
    %1433 = vmatpush2.bf16.xpose.msra.mxu0 0
    %1434 = vmatprep.subr.bf16.mxu0 0
    %1435 = vmatpush2.bf16.xpose.msra.mxu0 0
    %1436 = vmatprep.subr.bf16.mxu0 0
    %1437 = vmatpush2.bf16.xpose.msra.mxu0 0
    %1438 = vmatprep.subr.bf16.mxu0 0
    %1439 = vmatpush2.bf16.xpose.msra.mxu0 0
    %1440 = vmatprep.subr.bf16.mxu0 0
    %1441 = vmatpush2.bf16.xpose.msra.mxu0 0
    %1442 = vmatprep.mubr.bf16.mxu0 0
    %1443 = vmatmul.mubr.bf16.gmra.mxu0 %v1336
    %v1444 = vpop.f32.mrf.mxu0
    %v1445 = vadd.f32 %v116, %v1444
    %v1446 = vpop.f32.mrf.mxu0
    %v1447 = vpop.f32.mrf.mxu0
    %v1448 = vadd.f32 %v117, %v1447
    %v1449 = vpop.f32.mrf.mxu0
    %1450 = vdwg.mxu0
    %v1451 = vsel %vm390, %v1445, -inf
    %1452 = vmax.xlane.f32.xlu0 %v1451
    %v1453 = vpop.xlane.xlu0 %1452
    %v1454 = vsel %vm390, %v1448, -inf
    %1455 = vmax.xlane.f32.xlu0 %v1454
    %v1456 = vpop.xlane.xlu0 %1455
    %v1457 = vsub.f32 %v1445, %v1453
    %v1458 = vsub.f32 %v1448, %v1456
    %v1459 = vmul.f32 %v1457, 1.442695
    %v1460 = vpow.pop %v1459
    %v1461 = vmul.f32 %v1458, 1.442695
    %v1462 = vpow.pop %v1461
    %v1463 = vsel %vm390, %v1460, 0.0
    %1464 = vadd.xlane.f32.xlu0 %v1463
    %v1465 = vpop.xlane.xlu0 %1464
    %v1466 = vsel %vm390, %v1462, 0.0
    %1467 = vadd.xlane.f32.xlu0 %v1466
    %v1468 = vpop.xlane.xlu0 %1467
    %v1469 = vrcp.pop %v1465
    %v1470 = vrcp.pop %v1468
    %v1471 = vmul.f32 %v1460, %v1469
    %v1472 = vmul.f32 %v1462, %v1470
    %v1473 = vpack.c.bf16 %v1472, %v1471
    %v1474 = vmul.bf16 %v1333, %v129
    %v1476 = vsel %vm390, %v1473, 0
    %1478 = vmatprep.subr.bf16.mxu0 0
    %1479 = vmatpush1.bf16.msra.mxu0 0
    %1480 = vmatprep.subr.bf16.mxu0 0
    %1481 = vmatpush1.bf16.msra.mxu0 0
    %1482 = vmatprep.subr.bf16.mxu0 0
    %1483 = vmatpush1.bf16.msra.mxu0 0
    %1484 = vmatprep.subr.bf16.mxu0 0
    %1485 = vmatpush1.bf16.msra.mxu0 0
    %1486 = vmatprep.subr.bf16.mxu0 0
    %1487 = vmatpush1.bf16.msra.mxu0 0
    %1488 = vmatprep.subr.bf16.mxu0 0
    %1489 = vmatpush1.bf16.msra.mxu0 0
    %1490 = vmatprep.subr.bf16.mxu0 0
    %1491 = vmatpush1.bf16.msra.mxu0 0
    %1492 = vmatprep.subr.bf16.mxu0 0
    %1493 = vmatpush1.bf16.msra.mxu0 %v1474
    %1494 = vmatprep.subr.bf16.mxu0 0
    %1495 = vmatpush2.bf16.msra.mxu0 0
    %1496 = vmatprep.subr.bf16.mxu0 0
    %1497 = vmatpush2.bf16.msra.mxu0 0
    %1498 = vmatprep.subr.bf16.mxu0 0
    %1499 = vmatpush2.bf16.msra.mxu0 0
    %1500 = vmatprep.subr.bf16.mxu0 0
    %1501 = vmatpush2.bf16.msra.mxu0 0
    %1502 = vmatprep.subr.bf16.mxu0 0
    %1503 = vmatpush2.bf16.msra.mxu0 0
    %1504 = vmatprep.subr.bf16.mxu0 0
    %1505 = vmatpush2.bf16.msra.mxu0 0
    %1506 = vmatprep.subr.bf16.mxu0 0
    %1507 = vmatpush2.bf16.msra.mxu0 0
    %1508 = vmatprep.subr.bf16.mxu0 0
    %1509 = vmatpush2.bf16.msra.mxu0 0
    %1510 = vmatprep.mubr.bf16.mxu0 0
    %1511 = vmatmul.mubr.bf16.gmra.mxu0 %v1476
    %v1512 = vpop.f32.mrf.mxu0
    %v1513 = vadd.f32 0.0, %v1512
    %v1514 = vpop.f32.mrf.mxu0
    %v1515 = vpop.f32.mrf.mxu0
    %v1516 = vadd.f32 0.0, %v1515
    %v1517 = vpop.f32.mrf.mxu0
    %1518 = vdwg.mxu0
    %v1520 = vsel %vm390, %v1404, 0
    %1522 = vmatprep.subr.bf16.mxu0 0
    %1523 = vmatpush1.bf16.msra.mxu0 0
    %1524 = vmatprep.subr.bf16.mxu0 0
    %1525 = vmatpush1.bf16.msra.mxu0 0
    %1526 = vmatprep.subr.bf16.mxu0 0
    %1527 = vmatpush1.bf16.msra.mxu0 0
    %1528 = vmatprep.subr.bf16.mxu0 0
    %1529 = vmatpush1.bf16.msra.mxu0 0
    %1530 = vmatprep.subr.bf16.mxu0 0
    %1531 = vmatpush1.bf16.msra.mxu0 0
    %1532 = vmatprep.subr.bf16.mxu0 0
    %1533 = vmatpush1.bf16.msra.mxu0 0
    %1534 = vmatprep.subr.bf16.mxu0 0
    %1535 = vmatpush1.bf16.msra.mxu0 0
    %1536 = vmatprep.subr.bf16.mxu0 0
    %1537 = vmatpush1.bf16.msra.mxu0 %v1405
    %1538 = vmatprep.subr.bf16.mxu0 0
    %1539 = vmatpush2.bf16.msra.mxu0 0
    %1540 = vmatprep.subr.bf16.mxu0 0
    %1541 = vmatpush2.bf16.msra.mxu0 0
    %1542 = vmatprep.subr.bf16.mxu0 0
    %1543 = vmatpush2.bf16.msra.mxu0 0
    %1544 = vmatprep.subr.bf16.mxu0 0
    %1545 = vmatpush2.bf16.msra.mxu0 0
    %1546 = vmatprep.subr.bf16.mxu0 0
    %1547 = vmatpush2.bf16.msra.mxu0 0
    %1548 = vmatprep.subr.bf16.mxu0 0
    %1549 = vmatpush2.bf16.msra.mxu0 0
    %1550 = vmatprep.subr.bf16.mxu0 0
    %1551 = vmatpush2.bf16.msra.mxu0 0
    %1552 = vmatprep.subr.bf16.mxu0 0
    %1553 = vmatpush2.bf16.msra.mxu0 0
    %1554 = vmatprep.mubr.bf16.mxu0 0
    %1555 = vmatmul.mubr.bf16.gmra.mxu0 %v1520
    %v1556 = vpop.f32.mrf.mxu0
    %v1557 = vadd.f32 %v1513, %v1556
    %v1558 = vpop.f32.mrf.mxu0
    %v1559 = vpop.f32.mrf.mxu0
    %v1560 = vadd.f32 %v1516, %v1559
    %v1561 = vpop.f32.mrf.mxu0
    %1562 = vdwg.mxu0
    %v1563 = vmul.bf16 %v1332, %v134
    %v1565 = vsel %vm166, %v1563, 0
    %1567 = vmatprep.subr.bf16.mxu0 0
    %1568 = vmatpush1.bf16.xpose.msra.mxu0 0
    %1569 = vmatprep.subr.bf16.mxu0 0
    %1570 = vmatpush1.bf16.xpose.msra.mxu0 0
    %1571 = vmatprep.subr.bf16.mxu0 0
    %1572 = vmatpush1.bf16.xpose.msra.mxu0 0
    %1573 = vmatprep.subr.bf16.mxu0 0
    %1574 = vmatpush1.bf16.xpose.msra.mxu0 0
    %1575 = vmatprep.subr.bf16.mxu0 0
    %1576 = vmatpush1.bf16.xpose.msra.mxu0 0
    %1577 = vmatprep.subr.bf16.mxu0 0
    %1578 = vmatpush1.bf16.xpose.msra.mxu0 0
    %1579 = vmatprep.subr.bf16.mxu0 0
    %1580 = vmatpush1.bf16.xpose.msra.mxu0 0
    %1581 = vmatprep.subr.bf16.mxu0 0
    %1582 = vmatpush1.bf16.xpose.msra.mxu0 %v1565
    %1583 = vmatprep.subr.bf16.mxu0 0
    %1584 = vmatpush2.bf16.xpose.msra.mxu0 0
    %1585 = vmatprep.subr.bf16.mxu0 0
    %1586 = vmatpush2.bf16.xpose.msra.mxu0 0
    %1587 = vmatprep.subr.bf16.mxu0 0
    %1588 = vmatpush2.bf16.xpose.msra.mxu0 0
    %1589 = vmatprep.subr.bf16.mxu0 0
    %1590 = vmatpush2.bf16.xpose.msra.mxu0 0
    %1591 = vmatprep.subr.bf16.mxu0 0
    %1592 = vmatpush2.bf16.xpose.msra.mxu0 0
    %1593 = vmatprep.subr.bf16.mxu0 0
    %1594 = vmatpush2.bf16.xpose.msra.mxu0 0
    %1595 = vmatprep.subr.bf16.mxu0 0
    %1596 = vmatpush2.bf16.xpose.msra.mxu0 0
    %1597 = vmatprep.subr.bf16.mxu0 0
    %1598 = vmatpush2.bf16.xpose.msra.mxu0 0
    %1599 = vmatprep.mubr.bf16.mxu0 0
    %1600 = vmatmul.mubr.bf16.gmra.mxu0 %v1336
    %v1601 = vpop.f32.mrf.mxu0
    %v1602 = vadd.f32 %v116, %v1601
    %v1603 = vpop.f32.mrf.mxu0
    %v1604 = vpop.f32.mrf.mxu0
    %v1605 = vadd.f32 %v117, %v1604
    %v1606 = vpop.f32.mrf.mxu0
    %1607 = vdwg.mxu0
    %v1608 = vsel %vm390, %v1602, -inf
    %1609 = vmax.xlane.f32.xlu0 %v1608
    %v1610 = vpop.xlane.xlu0 %1609
    %v1611 = vsel %vm390, %v1605, -inf
    %1612 = vmax.xlane.f32.xlu0 %v1611
    %v1613 = vpop.xlane.xlu0 %1612
    %v1614 = vsub.f32 %v1602, %v1610
    %v1615 = vsub.f32 %v1605, %v1613
    %v1616 = vmul.f32 %v1614, 1.442695
    %v1617 = vpow.pop %v1616
    %v1618 = vmul.f32 %v1615, 1.442695
    %v1619 = vpow.pop %v1618
    %v1620 = vsel %vm390, %v1617, 0.0
    %1621 = vadd.xlane.f32.xlu0 %v1620
    %v1622 = vpop.xlane.xlu0 %1621
    %v1623 = vsel %vm390, %v1619, 0.0
    %1624 = vadd.xlane.f32.xlu0 %v1623
    %v1625 = vpop.xlane.xlu0 %1624
    %v1626 = vrcp.pop %v1622
    %v1627 = vrcp.pop %v1625
    %v1628 = vmul.f32 %v1617, %v1626
    %v1629 = vmul.f32 %v1619, %v1627
    %v1630 = vpack.c.bf16 %v1629, %v1628
    %v1631 = vmul.bf16 %v1333, %v134
    %v1633 = vsel %vm390, %v1630, 0
    %1635 = vmatprep.subr.bf16.mxu0 0
    %1636 = vmatpush1.bf16.msra.mxu0 0
    %1637 = vmatprep.subr.bf16.mxu0 0
    %1638 = vmatpush1.bf16.msra.mxu0 0
    %1639 = vmatprep.subr.bf16.mxu0 0
    %1640 = vmatpush1.bf16.msra.mxu0 0
    %1641 = vmatprep.subr.bf16.mxu0 0
    %1642 = vmatpush1.bf16.msra.mxu0 0
    %1643 = vmatprep.subr.bf16.mxu0 0
    %1644 = vmatpush1.bf16.msra.mxu0 0
    %1645 = vmatprep.subr.bf16.mxu0 0
    %1646 = vmatpush1.bf16.msra.mxu0 0
    %1647 = vmatprep.subr.bf16.mxu0 0
    %1648 = vmatpush1.bf16.msra.mxu0 0
    %1649 = vmatprep.subr.bf16.mxu0 0
    %1650 = vmatpush1.bf16.msra.mxu0 %v1631
    %1651 = vmatprep.subr.bf16.mxu0 0
    %1652 = vmatpush2.bf16.msra.mxu0 0
    %1653 = vmatprep.subr.bf16.mxu0 0
    %1654 = vmatpush2.bf16.msra.mxu0 0
    %1655 = vmatprep.subr.bf16.mxu0 0
    %1656 = vmatpush2.bf16.msra.mxu0 0
    %1657 = vmatprep.subr.bf16.mxu0 0
    %1658 = vmatpush2.bf16.msra.mxu0 0
    %1659 = vmatprep.subr.bf16.mxu0 0
    %1660 = vmatpush2.bf16.msra.mxu0 0
    %1661 = vmatprep.subr.bf16.mxu0 0
    %1662 = vmatpush2.bf16.msra.mxu0 0
    %1663 = vmatprep.subr.bf16.mxu0 0
    %1664 = vmatpush2.bf16.msra.mxu0 0
    %1665 = vmatprep.subr.bf16.mxu0 0
    %1666 = vmatpush2.bf16.msra.mxu0 0
    %1667 = vmatprep.mubr.bf16.mxu0 0
    %1668 = vmatmul.mubr.bf16.gmra.mxu0 %v1633
    %v1669 = vpop.f32.mrf.mxu0
    %v1670 = vadd.f32 0.0, %v1669
    %v1671 = vpop.f32.mrf.mxu0
    %v1672 = vpop.f32.mrf.mxu0
    %v1673 = vadd.f32 0.0, %v1672
    %v1674 = vpop.f32.mrf.mxu0
    %1675 = vdwg.mxu0
    %v1676 = vadd.f32 %v1557, %v1670
    %v1677 = vadd.f32 %v1560, %v1673
    %v1678 = vmul.bf16 %v1332, %v139
    %v1680 = vsel %vm166, %v1678, 0
    %1682 = vmatprep.subr.bf16.mxu0 0
    %1683 = vmatpush1.bf16.xpose.msra.mxu0 0
    %1684 = vmatprep.subr.bf16.mxu0 0
    %1685 = vmatpush1.bf16.xpose.msra.mxu0 0
    %1686 = vmatprep.subr.bf16.mxu0 0
    %1687 = vmatpush1.bf16.xpose.msra.mxu0 0
    %1688 = vmatprep.subr.bf16.mxu0 0
    %1689 = vmatpush1.bf16.xpose.msra.mxu0 0
    %1690 = vmatprep.subr.bf16.mxu0 0
    %1691 = vmatpush1.bf16.xpose.msra.mxu0 0
    %1692 = vmatprep.subr.bf16.mxu0 0
    %1693 = vmatpush1.bf16.xpose.msra.mxu0 0
    %1694 = vmatprep.subr.bf16.mxu0 0
    %1695 = vmatpush1.bf16.xpose.msra.mxu0 0
    %1696 = vmatprep.subr.bf16.mxu0 0
    %1697 = vmatpush1.bf16.xpose.msra.mxu0 %v1680
    %1698 = vmatprep.subr.bf16.mxu0 0
    %1699 = vmatpush2.bf16.xpose.msra.mxu0 0
    %1700 = vmatprep.subr.bf16.mxu0 0
    %1701 = vmatpush2.bf16.xpose.msra.mxu0 0
    %1702 = vmatprep.subr.bf16.mxu0 0
    %1703 = vmatpush2.bf16.xpose.msra.mxu0 0
    %1704 = vmatprep.subr.bf16.mxu0 0
    %1705 = vmatpush2.bf16.xpose.msra.mxu0 0
    %1706 = vmatprep.subr.bf16.mxu0 0
    %1707 = vmatpush2.bf16.xpose.msra.mxu0 0
    %1708 = vmatprep.subr.bf16.mxu0 0
    %1709 = vmatpush2.bf16.xpose.msra.mxu0 0
    %1710 = vmatprep.subr.bf16.mxu0 0
    %1711 = vmatpush2.bf16.xpose.msra.mxu0 0
    %1712 = vmatprep.subr.bf16.mxu0 0
    %1713 = vmatpush2.bf16.xpose.msra.mxu0 0
    %1714 = vmatprep.mubr.bf16.mxu0 0
    %1715 = vmatmul.mubr.bf16.gmra.mxu0 %v1336
    %v1716 = vpop.f32.mrf.mxu0
    %v1717 = vadd.f32 %v116, %v1716
    %v1718 = vpop.f32.mrf.mxu0
    %v1719 = vpop.f32.mrf.mxu0
    %v1720 = vadd.f32 %v117, %v1719
    %v1721 = vpop.f32.mrf.mxu0
    %1722 = vdwg.mxu0
    %v1723 = vsel %vm390, %v1717, -inf
    %1724 = vmax.xlane.f32.xlu0 %v1723
    %v1725 = vpop.xlane.xlu0 %1724
    %v1726 = vsel %vm390, %v1720, -inf
    %1727 = vmax.xlane.f32.xlu0 %v1726
    %v1728 = vpop.xlane.xlu0 %1727
    %v1729 = vsub.f32 %v1717, %v1725
    %v1730 = vsub.f32 %v1720, %v1728
    %v1731 = vmul.f32 %v1729, 1.442695
    %v1732 = vpow.pop %v1731
    %v1733 = vmul.f32 %v1730, 1.442695
    %v1734 = vpow.pop %v1733
    %v1735 = vsel %vm390, %v1732, 0.0
    %1736 = vadd.xlane.f32.xlu0 %v1735
    %v1737 = vpop.xlane.xlu0 %1736
    %v1738 = vsel %vm390, %v1734, 0.0
    %1739 = vadd.xlane.f32.xlu0 %v1738
    %v1740 = vpop.xlane.xlu0 %1739
    %v1741 = vrcp.pop %v1737
    %v1742 = vrcp.pop %v1740
    %v1743 = vmul.f32 %v1732, %v1741
    %v1744 = vmul.f32 %v1734, %v1742
    %v1745 = vpack.c.bf16 %v1744, %v1743
    %v1746 = vmul.bf16 %v1333, %v139
    %v1748 = vsel %vm390, %v1745, 0
    %1750 = vmatprep.subr.bf16.mxu0 0
    %1751 = vmatpush1.bf16.msra.mxu0 0
    %1752 = vmatprep.subr.bf16.mxu0 0
    %1753 = vmatpush1.bf16.msra.mxu0 0
    %1754 = vmatprep.subr.bf16.mxu0 0
    %1755 = vmatpush1.bf16.msra.mxu0 0
    %1756 = vmatprep.subr.bf16.mxu0 0
    %1757 = vmatpush1.bf16.msra.mxu0 0
    %1758 = vmatprep.subr.bf16.mxu0 0
    %1759 = vmatpush1.bf16.msra.mxu0 0
    %1760 = vmatprep.subr.bf16.mxu0 0
    %1761 = vmatpush1.bf16.msra.mxu0 0
    %1762 = vmatprep.subr.bf16.mxu0 0
    %1763 = vmatpush1.bf16.msra.mxu0 0
    %1764 = vmatprep.subr.bf16.mxu0 0
    %1765 = vmatpush1.bf16.msra.mxu0 %v1746
    %1766 = vmatprep.subr.bf16.mxu0 0
    %1767 = vmatpush2.bf16.msra.mxu0 0
    %1768 = vmatprep.subr.bf16.mxu0 0
    %1769 = vmatpush2.bf16.msra.mxu0 0
    %1770 = vmatprep.subr.bf16.mxu0 0
    %1771 = vmatpush2.bf16.msra.mxu0 0
    %1772 = vmatprep.subr.bf16.mxu0 0
    %1773 = vmatpush2.bf16.msra.mxu0 0
    %1774 = vmatprep.subr.bf16.mxu0 0
    %1775 = vmatpush2.bf16.msra.mxu0 0
    %1776 = vmatprep.subr.bf16.mxu0 0
    %1777 = vmatpush2.bf16.msra.mxu0 0
    %1778 = vmatprep.subr.bf16.mxu0 0
    %1779 = vmatpush2.bf16.msra.mxu0 0
    %1780 = vmatprep.subr.bf16.mxu0 0
    %1781 = vmatpush2.bf16.msra.mxu0 0
    %1782 = vmatprep.mubr.bf16.mxu0 0
    %1783 = vmatmul.mubr.bf16.gmra.mxu0 %v1748
    %v1784 = vpop.f32.mrf.mxu0
    %v1785 = vadd.f32 0.0, %v1784
    %v1786 = vpop.f32.mrf.mxu0
    %v1787 = vpop.f32.mrf.mxu0
    %v1788 = vadd.f32 0.0, %v1787
    %v1789 = vpop.f32.mrf.mxu0
    %1790 = vdwg.mxu0
    %v1791 = vadd.f32 %v1676, %v1785
    %v1792 = vadd.f32 %v1677, %v1788
    %v1793 = vpack.c.bf16 %v1792, %v1791
    %s1794 = scalar_lea.vmem [#allocation7], 16
    %v1795 = vld [vmem:[%s1794] sm:$0xf]
    %v1796 = vld [vmem:[%s1794 + $0x4] sm:$0xf]
    %v1797 = vld [vmem:[%s1794 + $0x8] sm:$0xf]
    %v1798 = vld [vmem:[%s1794 + $0xc] sm:$0xf]
    %s1799 = scalar_lea.vmem %s9, 1
    %v1800 = vld [vmem:[%s1799] sm:$0x1]
    %v1802 = vlaneseq
    %v1803 = vshrl.u32 %v1802, 7
    %v1804 = vsub.s32 0, %v1803
    %v1805 = vrot.slane %v1800, %v1804
    %v1811 = vunpack.c.l.b16 %v1795
    %v1812 = vunpack.c.l.b16 %v1796
    %v1813 = vunpack.c.l.b16 %v1797
    %v1814 = vunpack.c.l.b16 %v1798
    %v1815 = vpack.c.b16 %v1812, %v1811
    %v1816 = vpack.c.b16 %v1814, %v1813
    %v1820 = vsel %vm166, %v1793, 0
    %1822 = vmatprep.subr.bf16.mxu0 0
    %1823 = vmatpush1.bf16.msra.mxu0 0
    %1824 = vmatprep.subr.bf16.mxu0 0
    %1825 = vmatpush1.bf16.msra.mxu0 0
    %1826 = vmatprep.subr.bf16.mxu0 0
    %1827 = vmatpush1.bf16.msra.mxu0 0
    %1828 = vmatprep.subr.bf16.mxu0 0
    %1829 = vmatpush1.bf16.msra.mxu0 0
    %1830 = vmatprep.subr.bf16.mxu0 0
    %1831 = vmatpush1.bf16.msra.mxu0 0
    %1832 = vmatprep.subr.bf16.mxu0 0
    %1833 = vmatpush1.bf16.msra.mxu0 0
    %1834 = vmatprep.subr.bf16.mxu0 0
    %1835 = vmatpush1.bf16.msra.mxu0 %v1816
    %1836 = vmatprep.subr.bf16.mxu0 0
    %1837 = vmatpush1.bf16.msra.mxu0 %v1815
    %1838 = vmatprep.subr.bf16.mxu0 0
    %1839 = vmatpush2.bf16.msra.mxu0 0
    %1840 = vmatprep.subr.bf16.mxu0 0
    %1841 = vmatpush2.bf16.msra.mxu0 0
    %1842 = vmatprep.subr.bf16.mxu0 0
    %1843 = vmatpush2.bf16.msra.mxu0 0
    %1844 = vmatprep.subr.bf16.mxu0 0
    %1845 = vmatpush2.bf16.msra.mxu0 0
    %1846 = vmatprep.subr.bf16.mxu0 0
    %1847 = vmatpush2.bf16.msra.mxu0 0
    %1848 = vmatprep.subr.bf16.mxu0 0
    %1849 = vmatpush2.bf16.msra.mxu0 0
    %1850 = vmatprep.subr.bf16.mxu0 0
    %1851 = vmatpush2.bf16.msra.mxu0 0
    %1852 = vmatprep.subr.bf16.mxu0 0
    %1853 = vmatpush2.bf16.msra.mxu0 0
    %1854 = vmatprep.mubr.bf16.mxu0 0
    %1855 = vmatmul.mubr.bf16.gmra.mxu0 %v1820
    %v1856 = vpop.f32.mrf.mxu0
    %v1857 = vadd.f32 %v1805, %v1856
    %v1858 = vpop.f32.mrf.mxu0
    %v1859 = vpop.f32.mrf.mxu0
    %v1860 = vadd.f32 %v1805, %v1859
    %v1861 = vpop.f32.mrf.mxu0
    %1862 = vdwg.mxu0
    %v1863 = vadd.f32 %v1127, %v1857
    %v1864 = vadd.f32 %v1128, %v1860
    %s1865 = scalar_lea.vmem %s10, 1
    %v1866 = vld [vmem:[%s1865] sm:$0x1]
    %s1867 = scalar_lea.vmem %s11, 1
    %v1868 = vld [vmem:[%s1867] sm:$0x1]
    %v1869 = vsel %vm166, %v1863, 0.0
    %1870 = vadd.xlane.f32.xlu0 %v1869
    %v1871 = vpop.xlane.xlu0 %1870
    %v1872 = vsel %vm166, %v1864, 0.0
    %1873 = vadd.xlane.f32.xlu0 %v1872
    %v1874 = vpop.xlane.xlu0 %1873
    %v1875 = vmul.f32 %v1871, %v880
    %v1876 = vmul.f32 %v1874, %v880
    %v1877 = vsub.f32 %v1863, %v1875
    %v1878 = vsub.f32 %v1864, %v1876
    %v1879 = vmul.f32 %v1877, %v1877
    %v1880 = vmul.f32 %v1878, %v1878
    %v1881 = vsel %vm166, %v1879, 0.0
    %1882 = vadd.xlane.f32.xlu0 %v1881
    %v1883 = vpop.xlane.xlu0 %1882
    %v1884 = vsel %vm166, %v1880, 0.0
    %1885 = vadd.xlane.f32.xlu0 %v1884
    %v1886 = vpop.xlane.xlu0 %1885
    %v1887 = vmul.f32 %v1883, %v880
    %v1888 = vmul.f32 %v1886, %v880
    %v1889 = vadd.f32 %v1887, 1e-12
    %v1890 = vadd.f32 %v1888, 1e-12
    %v1891 = vrsqrt.pop %v1889
    %v1892 = vrsqrt.pop %v1890
    %v1893 = vmul.f32 %v1877, %v1891
    %v1894 = vmul.f32 %v1878, %v1892
    %v1896 = vlaneseq
    %v1897 = vshrl.u32 %v1896, 7
    %v1898 = vsub.s32 0, %v1897
    %v1899 = vrot.slane %v1866, %v1898
    %v1901 = vmul.f32 %v1893, %v1899
    %v1902 = vmul.f32 %v1894, %v1899
    %v1904 = vlaneseq
    %v1905 = vshrl.u32 %v1904, 7
    %v1906 = vsub.s32 0, %v1905
    %v1907 = vrot.slane %v1868, %v1906
    %v1909 = vadd.f32 %v1901, %v1907
    %v1910 = vadd.f32 %v1902, %v1907
    %v1911 = vpack.c.bf16 %v1910, %v1909
    %s1912 = scalar_lea.vmem [#allocation8], 16
    %v1913 = vld [vmem:[%s1912] sm:$0xf]
    %v1914 = vld [vmem:[%s1912 + $0x4] sm:$0xf]
    %v1915 = vld [vmem:[%s1912 + $0x8] sm:$0xf]
    %v1916 = vld [vmem:[%s1912 + $0xc] sm:$0xf]
    %s1917 = scalar_lea.vmem %s13, 1
    %v1918 = vld [vmem:[%s1917] sm:$0x1]
    %v1920 = vlaneseq
    %v1921 = vshrl.u32 %v1920, 7
    %v1922 = vsub.s32 0, %v1921
    %v1923 = vrot.slane %v1918, %v1922
    %v1929 = vunpack.c.l.b16 %v1913
    %v1930 = vunpack.c.l.b16 %v1914
    %v1931 = vunpack.c.l.b16 %v1915
    %v1932 = vunpack.c.l.b16 %v1916
    %v1933 = vpack.c.b16 %v1930, %v1929
    %v1934 = vpack.c.b16 %v1932, %v1931
    %v1938 = vsel %vm166, %v1911, 0
    %1940 = vmatprep.subr.bf16.mxu0 0
    %1941 = vmatpush1.bf16.msra.mxu0 0
    %1942 = vmatprep.subr.bf16.mxu0 0
    %1943 = vmatpush1.bf16.msra.mxu0 0
    %1944 = vmatprep.subr.bf16.mxu0 0
    %1945 = vmatpush1.bf16.msra.mxu0 0
    %1946 = vmatprep.subr.bf16.mxu0 0
    %1947 = vmatpush1.bf16.msra.mxu0 0
    %1948 = vmatprep.subr.bf16.mxu0 0
    %1949 = vmatpush1.bf16.msra.mxu0 0
    %1950 = vmatprep.subr.bf16.mxu0 0
    %1951 = vmatpush1.bf16.msra.mxu0 0
    %1952 = vmatprep.subr.bf16.mxu0 0
    %1953 = vmatpush1.bf16.msra.mxu0 %v1934
    %1954 = vmatprep.subr.bf16.mxu0 0
    %1955 = vmatpush1.bf16.msra.mxu0 %v1933
    %1956 = vmatprep.subr.bf16.mxu0 0
    %1957 = vmatpush2.bf16.msra.mxu0 0
    %1958 = vmatprep.subr.bf16.mxu0 0
    %1959 = vmatpush2.bf16.msra.mxu0 0
    %1960 = vmatprep.subr.bf16.mxu0 0
    %1961 = vmatpush2.bf16.msra.mxu0 0
    %1962 = vmatprep.subr.bf16.mxu0 0
    %1963 = vmatpush2.bf16.msra.mxu0 0
    %1964 = vmatprep.subr.bf16.mxu0 0
    %1965 = vmatpush2.bf16.msra.mxu0 0
    %1966 = vmatprep.subr.bf16.mxu0 0
    %1967 = vmatpush2.bf16.msra.mxu0 0
    %1968 = vmatprep.subr.bf16.mxu0 0
    %1969 = vmatpush2.bf16.msra.mxu0 0
    %1970 = vmatprep.subr.bf16.mxu0 0
    %1971 = vmatpush2.bf16.msra.mxu0 0
    %1972 = vmatprep.mubr.bf16.mxu0 0
    %1973 = vmatmul.mubr.bf16.gmra.mxu0 %v1938
    %v1974 = vpop.f32.mrf.mxu0
    %v1975 = vadd.f32 %v1923, %v1974
    %v1976 = vpop.f32.mrf.mxu0
    %v1977 = vpop.f32.mrf.mxu0
    %v1978 = vadd.f32 %v1923, %v1977
    %v1979 = vpop.f32.mrf.mxu0
    %1980 = vdwg.mxu0
    %v1981 = vmul.f32 %v1975, 0.5
    %v1982 = vmul.f32 %v1978, 0.5
    %v1983 = vmul.f32 %v1975, 0.70710677
    %v1984 = vmul.f32 %v1978, 0.70710677
    %v1985 = verf.f32.pop %v1983
    %v1986 = verf.f32.pop %v1984
    %v1987 = vadd.f32 %v1985, 1.0
    %v1988 = vadd.f32 %v1986, 1.0
    %v1989 = vmul.f32 %v1981, %v1987
    %v1990 = vmul.f32 %v1982, %v1988
    %v1991 = vpack.c.bf16 %v1990, %v1989
    %s1992 = scalar_lea.vmem %s14, 32
    %v1993 = vld [vmem:[%s1992] sm:$0xf]
    %v1994 = vld [vmem:[%s1992 + $0x4] sm:$0xf]
    %v1995 = vld [vmem:[%s1992 + $0x8] sm:$0xf]
    %v1996 = vld [vmem:[%s1992 + $0xc] sm:$0xf]
    %v1997 = vld [vmem:[%s1992 + $0x10] sm:$0xf]
    %v1998 = vld [vmem:[%s1992 + $0x14] sm:$0xf]
    %v1999 = vld [vmem:[%s1992 + $0x18] sm:$0xf]
    %v2000 = vld [vmem:[%s1992 + $0x1c] sm:$0xf]
    %s2001 = scalar_lea.vmem %s15, 1
    %v2002 = vld [vmem:[%s2001] sm:$0x1]
    %v2004 = vlaneseq
    %v2005 = vshrl.u32 %v2004, 7
    %v2006 = vsub.s32 0, %v2005
    %v2007 = vrot.slane %v2002, %v2006
    %v2017 = vunpack.c.l.b16 %v1993
    %v2018 = vunpack.c.l.b16 %v1994
    %v2019 = vunpack.c.l.b16 %v1995
    %v2020 = vunpack.c.l.b16 %v1996
    %v2021 = vunpack.c.l.b16 %v1997
    %v2022 = vunpack.c.l.b16 %v1998
    %v2023 = vunpack.c.l.b16 %v1999
    %v2024 = vunpack.c.l.b16 %v2000
    %v2025 = vpack.c.b16 %v2018, %v2017
    %v2026 = vpack.c.b16 %v2020, %v2019
    %v2027 = vpack.c.b16 %v2022, %v2021
    %v2028 = vpack.c.b16 %v2024, %v2023
    %v2034 = vsel %vm1035, %v1991, 0
    %2036 = vmatprep.subr.bf16.mxu0 0
    %2037 = vmatpush1.bf16.msra.mxu0 0
    %2038 = vmatprep.subr.bf16.mxu0 0
    %2039 = vmatpush1.bf16.msra.mxu0 0
    %2040 = vmatprep.subr.bf16.mxu0 0
    %2041 = vmatpush1.bf16.msra.mxu0 0
    %2042 = vmatprep.subr.bf16.mxu0 0
    %2043 = vmatpush1.bf16.msra.mxu0 0
    %2044 = vmatprep.subr.bf16.mxu0 0
    %2045 = vmatpush1.bf16.msra.mxu0 %v2028
    %2046 = vmatprep.subr.bf16.mxu0 0
    %2047 = vmatpush1.bf16.msra.mxu0 %v2027
    %2048 = vmatprep.subr.bf16.mxu0 0
    %2049 = vmatpush1.bf16.msra.mxu0 %v2026
    %2050 = vmatprep.subr.bf16.mxu0 0
    %2051 = vmatpush1.bf16.msra.mxu0 %v2025
    %2052 = vmatprep.subr.bf16.mxu0 0
    %2053 = vmatpush2.bf16.msra.mxu0 0
    %2054 = vmatprep.subr.bf16.mxu0 0
    %2055 = vmatpush2.bf16.msra.mxu0 0
    %2056 = vmatprep.subr.bf16.mxu0 0
    %2057 = vmatpush2.bf16.msra.mxu0 0
    %2058 = vmatprep.subr.bf16.mxu0 0
    %2059 = vmatpush2.bf16.msra.mxu0 0
    %2060 = vmatprep.subr.bf16.mxu0 0
    %2061 = vmatpush2.bf16.msra.mxu0 0
    %2062 = vmatprep.subr.bf16.mxu0 0
    %2063 = vmatpush2.bf16.msra.mxu0 0
    %2064 = vmatprep.subr.bf16.mxu0 0
    %2065 = vmatpush2.bf16.msra.mxu0 0
    %2066 = vmatprep.subr.bf16.mxu0 0
    %2067 = vmatpush2.bf16.msra.mxu0 0
    %2068 = vmatprep.mubr.bf16.mxu0 0
    %2069 = vmatmul.mubr.bf16.gmra.mxu0 %v2034
    %v2070 = vpop.f32.mrf.mxu0
    %v2071 = vadd.f32 %v2007, %v2070
    %v2072 = vpop.f32.mrf.mxu0
    %v2073 = vpop.f32.mrf.mxu0
    %v2074 = vadd.f32 %v2007, %v2073
    %v2075 = vpop.f32.mrf.mxu0
    %2076 = vdwg.mxu0
    %v2077 = vadd.f32 %v1909, %v2071
    %v2078 = vadd.f32 %v1910, %v2074
    %s2079 = scalar_lea.vmem %s16, 1
    %v2080 = vld [vmem:[%s2079] sm:$0x1]
    %s2081 = scalar_lea.vmem %s17, 1
    %v2082 = vld [vmem:[%s2081] sm:$0x1]
    %v2083 = vsel %vm166, %v2077, 0.0
    %2084 = vadd.xlane.f32.xlu0 %v2083
    %v2085 = vpop.xlane.xlu0 %2084
    %v2086 = vsel %vm166, %v2078, 0.0
    %2087 = vadd.xlane.f32.xlu0 %v2086
    %v2088 = vpop.xlane.xlu0 %2087
    %v2089 = vmul.f32 %v2085, %v880
    %v2090 = vmul.f32 %v2088, %v880
    %v2091 = vsub.f32 %v2077, %v2089
    %v2092 = vsub.f32 %v2078, %v2090
    %v2093 = vmul.f32 %v2091, %v2091
    %v2094 = vmul.f32 %v2092, %v2092
    %v2095 = vsel %vm166, %v2093, 0.0
    %2096 = vadd.xlane.f32.xlu0 %v2095
    %v2097 = vpop.xlane.xlu0 %2096
    %v2098 = vsel %vm166, %v2094, 0.0
    %2099 = vadd.xlane.f32.xlu0 %v2098
    %v2100 = vpop.xlane.xlu0 %2099
    %v2101 = vmul.f32 %v2097, %v880
    %v2102 = vmul.f32 %v2100, %v880
    %v2103 = vadd.f32 %v2101, 1e-12
    %v2104 = vadd.f32 %v2102, 1e-12
    %v2105 = vrsqrt.pop %v2103
    %v2106 = vrsqrt.pop %v2104
    %v2107 = vmul.f32 %v2091, %v2105
    %v2108 = vmul.f32 %v2092, %v2106
    %v2110 = vlaneseq
    %v2111 = vshrl.u32 %v2110, 7
    %v2112 = vsub.s32 0, %v2111
    %v2113 = vrot.slane %v2080, %v2112
    %v2115 = vmul.f32 %v2107, %v2113
    %v2116 = vmul.f32 %v2108, %v2113
    %v2118 = vlaneseq
    %v2119 = vshrl.u32 %v2118, 7
    %v2120 = vsub.s32 0, %v2119
    %v2121 = vrot.slane %v2082, %v2120
    %v2123 = vadd.f32 %v2115, %v2121
    %v2124 = vadd.f32 %v2116, %v2121
    %v2125 = vadd.f32 %v1124, %v2123
    %v2126 = vadd.f32 %v1125, %v2124
    %v2127 = vmul.f32 %v2125, 0.5
    %v2128 = vmul.f32 %v2126, 0.5
    %2129 = vst.msk [vmem:[#allocation10] sm:$0xff] %vm166, %v2127
    %2130 = vst.msk [vmem:[#allocation10 + $0x8] sm:$0xff] %vm166, %v2128
    // Predicated region
    $region90: #{tpu_custom_call.1} parent=1 // pred_check
      _
    $region91: #{tpu_custom_call.1} parent=1 // pred_check_branch
      %2132 = sbr.rel (0) target = $region93
    $region92: #{tpu_custom_call.1} parent=1 // pred_region
      %s2134 = ssub.s32 256, 256
      %2135 = vsyncadd [#allocation4], %s2134
      %s2136 = sshll.u32 [#allocation10], 4
      %s2137 = int_to_ptr.vmem [resolvable:$true] %s2136
      %2142 = dma.vmem_to_hbm [thread:$0]  %s2137, 256, %s18, [#allocation4], 128, 128, 8
    $region93: #{tpu_custom_call.1} parent=1 // pred_fallthru
      _
    // Predicated region
    $region94: #{tpu_custom_call.1} parent=1 // pred_check
      _
    $region95: #{tpu_custom_call.1} parent=1 // pred_check_branch
      %2144 = sbr.rel (0) target = $region97
    $region96: #{tpu_custom_call.1} parent=1 // pred_region
      %2145 = dma.done [#allocation4], 256
    $region97: #{tpu_custom_call.1} parent=1 // pred_fallthru
      _
    %2146 = vsyncpa [#allocation3], 1
    %2147 = vsyncpa [#allocation6], 1
    %2148 = vsyncpa [#allocation9], 1
    %2149 = vsyncpa [#allocation4], 1

</llo_original>
